<compile_context>
chip_gen: v7x
topology: tpu7x:2x2x1
jax: 0.10.0
libtpu: 0.0.40
codegen_flags: <defaults>
</compile_context>

<pallas_src>
import math
import numpy as np
import jax
import jax.numpy as jnp
from jax.experimental import pallas as pl
from jax.experimental.pallas import tpu as pltpu


# ----------------------------------------------------------------------------
# Deterministic "parameter" setup (matches gaussian / create_window in utils.py)
# ----------------------------------------------------------------------------
def _gaussian_1d(window_size: int, sigma: float) -> np.ndarray:
    g = np.array(
        [math.exp(-((x - window_size // 2) ** 2) / float(2 * sigma ** 2))
         for x in range(window_size)],
        dtype=np.float32,
    )
    return (g / g.sum()).astype(np.float32)


def _create_window_2d(window_size: int) -> np.ndarray:
    g = _gaussian_1d(window_size, 1.5).reshape(-1, 1)          # (K, 1)
    return (g @ g.T).astype(np.float32)                        # (K, K)


def _toeplitz_band(g1d: np.ndarray, W: int) -> np.ndarray:
    """Banded (W, OW) matrix T with T[ow+dj, ow] = g[dj]; x @ T == valid 1-D conv."""
    K = g1d.shape[0]
    OW = W - K + 1
    T = np.zeros((W, OW), dtype=np.float32)
    for ow in range(OW):
        T[ow:ow + K, ow] = g1d
    return T


def _pick_channel_block(N: int, H: int, W: int, OH: int, OW: int,
                        budget_bytes: int = 20 * 1024 * 1024) -> int:
    """Largest divisor of N whose per-step f32 working set fits the VMEM budget."""
    per_img = 4 * (4 * H * W        # x1/x2 input tiles, double-buffered
                   + 5 * H * W      # stacked products (img1, img2, sq/cross terms)
                   + 5 * H * OW     # MXU lane-pass result
                   + 16 * OH * OW)  # H-pass accumulator + SSIM-map temporaries
    cap = max(1, budget_bytes // per_img)
    cb = 1
    for d in range(1, N + 1):
        if N % d == 0 and d <= cap:
            cb = d
    return cb


# ----------------------------------------------------------------------------
# Pallas kernel
# ----------------------------------------------------------------------------
def _make_ssim_kernel(g1d: np.ndarray, Cb: int, H: int, W: int):
    K = g1d.shape[0]
    OH = H - K + 1
    OW = W - K + 1
    taps = [float(v) for v in g1d]           # static scalar immediates

    def kernel(c_ref, t_ref, x1_ref, x2_ref, out_ref):
        C1 = c_ref[0]                         # SMEM scalars
        C2 = c_ref[1]
        T = t_ref[...]                        # (W, OW) banded Gaussian (VMEM)

        x1 = x1_ref[...].astype(jnp.float32)  # (Cb, H, W)
        x2 = x2_ref[...].astype(jnp.float32)  # (Cb, H, W)

        # Five images that all get the same depthwise Gaussian filter.
        S = jnp.concatenate([x1, x2, x1 * x1, x2 * x2, x1 * x2], axis=0)  # (5Cb,H,W)

        # ---- lane-direction (W) Gaussian pass on the MXU (banded Toeplitz matmul)
        Y = jnp.dot(S.reshape(5 * Cb * H, W), T,
                    preferred_element_type=jnp.float32)                  # (5Cb*H, OW)
        Y = Y.reshape(5 * Cb, H, OW)

        # ---- sublane-direction (H) Gaussian pass: K shifted multiply-adds (VPU)
        acc = taps[0] * Y[:, 0:OH, :]
        for di in range(1, K):
            acc = acc + taps[di] * Y[:, di:di + OH, :]                   # (5Cb,OH,OW)

        mu1 = acc[0 * Cb:1 * Cb]
        mu2 = acc[1 * Cb:2 * Cb]
        e11 = acc[2 * Cb:3 * Cb]
        e22 = acc[3 * Cb:4 * Cb]
        e12 = acc[4 * Cb:5 * Cb]

        mu1_sq = mu1 * mu1
        mu2_sq = mu2 * mu2
        mu1_mu2 = mu1 * mu2
        sigma1_sq = e11 - mu1_sq
        sigma2_sq = e22 - mu2_sq
        sigma12 = e12 - mu1_mu2

        v1 = 2.0 * sigma12 + C2
        v2 = sigma1_sq + sigma2_sq + C2
        ssim_map = (2.0 * mu1_mu2 + C1) * v1 / ((mu1_sq + mu2_sq + C1) * v2)

        # Independent per-step partial sum (no serial accumulator, grid can be
        # 'parallel'); the final mean is finished in JAX.
        out_ref[...] = jnp.sum(ssim_map).reshape(1, 1)

    return kernel


# ----------------------------------------------------------------------------
# Wrapper (equivalent of SSIM().forward(img1, img2) with defaults:
#   window_size=11, size_average=True, val_range=None)
# ----------------------------------------------------------------------------
def ssim_pallas(img1: jax.Array, img2: jax.Array,
                window_size: int = 11, val_range=None) -> jax.Array:
    B, C, H, W = img1.shape
    assert img2.shape == img1.shape
    K = window_size
    assert H >= K and W >= K, "valid conv needs H,W >= window_size"

    g1d = _gaussian_1d(K, 1.5)
    OH, OW = H - K + 1, W - K + 1
    N = B * C

    # val_range=None branch of ssim(): data-dependent dynamic range L
    # (small global max/min reduction kept in JAX glue).
    if val_range is None:
        max_val = jnp.where(jnp.max(img1) > 128.0, 255.0, 1.0)
        min_val = jnp.where(jnp.min(img1) < -0.5, -1.0, 0.0)
        L = (max_val - min_val).astype(jnp.float32)
    else:
        L = jnp.float32(val_range)
    C1 = (0.01 * L) ** 2
    C2 = (0.03 * L) ** 2
    consts = jnp.stack([C1, C2]).astype(jnp.float32)            # (2,) -> SMEM

    Tmat = jnp.asarray(_toeplitz_band(g1d, W))                  # (W, OW) const

    # Keep the input dtype; the cast to f32 happens inside the kernel.
    x1 = img1.reshape(N, H, W)
    x2 = img2.reshape(N, H, W)

    Cb = _pick_channel_block(N, H, W, OH, OW)
    G = N // Cb

    kernel = _make_ssim_kernel(g1d, Cb, H, W)

    partials = pl.pallas_call(
        kernel,
        out_shape=jax.ShapeDtypeStruct((G, 1), jnp.float32),
        grid_spec=pltpu.PrefetchScalarGridSpec(
            num_scalar_prefetch=0,
            grid=(G,),
            in_specs=[
                pl.BlockSpec(memory_space=pltpu.MemorySpace.SMEM),   # [C1, C2]
                pl.BlockSpec((W, OW), lambda i: (0, 0)),             # Toeplitz band
                pl.BlockSpec((Cb, H, W), lambda i: (i, 0, 0)),       # img1 channels
                pl.BlockSpec((Cb, H, W), lambda i: (i, 0, 0)),       # img2 channels
            ],
            out_specs=pl.BlockSpec((1, 1), lambda i: (i, 0)),        # per-step partial
        ),
        compiler_params=pltpu.CompilerParams(
            dimension_semantics=("parallel",),      # v7x megacore-friendly
            vmem_limit_bytes=48 * 1024 * 1024,
        ),
    )(consts, Tmat, x1, x2)

    inv_count = 1.0 / float(N * OH * OW)
    return jnp.sum(partials) * inv_count            # scalar (size_average=True)


# ----------------------------------------------------------------------------
# Pure-JAX reference (sanity check only)
# ----------------------------------------------------------------------------
def ssim_ref(img1, img2, window_size=11):
    B, C, H, W = img1.shape
    w2d = jnp.asarray(_create_window_2d(window_size))
    window = jnp.broadcast_to(w2d[None, None], (C, 1, window_size, window_size))

    def dwconv(x):
        return jax.lax.conv_general_dilated(
            x, window, window_strides=(1, 1), padding="VALID",
            feature_group_count=C, dimension_numbers=("NCHW", "OIHW", "NCHW"))

    max_val = jnp.where(jnp.max(img1) > 128.0, 255.0, 1.0)
    min_val = jnp.where(jnp.min(img1) < -0.5, -1.0, 0.0)
    L = max_val - min_val
    C1 = (0.01 * L) ** 2
    C2 = (0.03 * L) ** 2

    mu1, mu2 = dwconv(img1), dwconv(img2)
    mu1_sq, mu2_sq, mu1_mu2 = mu1 * mu1, mu2 * mu2, mu1 * mu2
    sigma1_sq = dwconv(img1 * img1) - mu1_sq
    sigma2_sq = dwconv(img2 * img2) - mu2_sq
    sigma12 = dwconv(img1 * img2) - mu1_mu2
    v1 = 2.0 * sigma12 + C2
    v2 = sigma1_sq + sigma2_sq + C2
    ssim_map = (2 * mu1_mu2 + C1) * v1 / ((mu1_sq + mu2_sq + C1) * v2)
    return jnp.mean(ssim_map)


if __name__ == "__main__":
    key = jax.random.PRNGKey(0)
    k1, k2 = jax.random.split(key)
    shape = (2, 4, 16, 16)
    img1 = jax.random.uniform(k1, shape, dtype=jnp.float32)
    # Correlated image pair -> well-conditioned SSIM (~0.9), like real use.
    img2 = jnp.clip(
        img1 + 0.2 * (jax.random.uniform(k2, shape, dtype=jnp.float32) - 0.5),
        0.0, 1.0)

    out = jax.block_until_ready(ssim_pallas(img1, img2))
    ref = jax.block_until_ready(ssim_ref(img1, img2))

    # The only op that may not be exact-f32 is the MXU lane-pass matmul; the
    # tolerance leaves headroom for reduced-precision MXU passes on some TPU
    # generations (with full-precision f32 passes the difference is ~1e-6).
    np.testing.assert_allclose(np.asarray(out), np.asarray(ref), rtol=1e-2, atol=1e-3)

    print("KERNEL_OK")
</pallas_src>

<mosaic_0001>
module attributes {stable_mosaic.version = 11 : i64} {
  func.func @kernel(%arg0: i32, %arg1: memref<2xf32, #tpu.memory_space<smem>>, %arg2: memref<16x6xf32, #tpu.memory_space<vmem>>, %arg3: memref<8x16x16xf32, #tpu.memory_space<vmem>>, %arg4: memref<8x16x16xf32, #tpu.memory_space<vmem>>, %arg5: memref<1x1xf32, #tpu.memory_space<vmem>>) attributes {dimension_semantics = [#tpu.dimension_semantics<parallel>], iteration_bounds = array<i64: 1>, scalar_prefetch = 0 : i64, scratch_operands = 0 : i64, tpu.core_type = #tpu.core_type<tc>, window_params = [{transform_indices = @transform_0, window_bounds = array<i64: 2>}, {pipeline_mode = #tpu.pipeline_mode<synchronous>, transform_indices = @transform_1, window_bounds = array<i64: 16, 6>}, {transform_indices = @transform_2, window_bounds = array<i64: 8, 16, 16>}, {transform_indices = @transform_3, window_bounds = array<i64: 8, 16, 16>}, {transform_indices = @transform_4, window_bounds = array<i64: 1, 1>}]} {
    %c0 = arith.constant 0 : index
    %0 = memref.load %arg1[%c0] : memref<2xf32, #tpu.memory_space<smem>>
    %c1 = arith.constant 1 : index
    %1 = memref.load %arg1[%c1] : memref<2xf32, #tpu.memory_space<smem>>
    %c0_0 = arith.constant 0 : index
    %c0_1 = arith.constant 0 : index
    %2 = vector.load %arg2[%c0_0, %c0_1] : memref<16x6xf32, #tpu.memory_space<vmem>>, vector<16x6xf32>
    %c0_2 = arith.constant 0 : index
    %c0_3 = arith.constant 0 : index
    %c0_4 = arith.constant 0 : index
    %3 = vector.load %arg3[%c0_2, %c0_3, %c0_4] : memref<8x16x16xf32, #tpu.memory_space<vmem>>, vector<8x16x16xf32>
    %c0_5 = arith.constant 0 : index
    %c0_6 = arith.constant 0 : index
    %c0_7 = arith.constant 0 : index
    %4 = vector.load %arg4[%c0_5, %c0_6, %c0_7] : memref<8x16x16xf32, #tpu.memory_space<vmem>>, vector<8x16x16xf32>
    %5 = arith.mulf %3, %3 : vector<8x16x16xf32>
    %6 = arith.mulf %4, %4 : vector<8x16x16xf32>
    %7 = arith.mulf %3, %4 : vector<8x16x16xf32>
    %8 = tpu.concatenate %3, %4, %5, %6, %7 in 0 : vector<8x16x16xf32>, vector<8x16x16xf32>, vector<8x16x16xf32>, vector<8x16x16xf32>, vector<8x16x16xf32> -> vector<40x16x16xf32>
    %9 = vector.shape_cast %8 : vector<40x16x16xf32> to vector<640x16xf32>
    %cst = arith.constant dense<0.000000e+00> : vector<640x6xf32>
    %10 = tpu.matmul %9, %2, %cst {dimension_numbers = #tpu.dot_dimension_numbers<[1], [0], [0], [1], [0, 0, 1, 1], [], []>} : vector<640x16xf32>, vector<16x6xf32>, vector<640x6xf32> -> vector<640x6xf32>
    %11 = vector.shape_cast %10 : vector<640x6xf32> to vector<40x16x6xf32>
    %12 = vector.extract_strided_slice %11 {offsets = [0, 0, 0], sizes = [40, 6, 6], strides = [1, 1, 1]} : vector<40x16x6xf32> to vector<40x6x6xf32>
    %cst_8 = arith.constant 0.00102838024 : f32
    %13 = vector.broadcast %cst_8 : f32 to vector<40x6x6xf32>
    %14 = arith.mulf %13, %12 : vector<40x6x6xf32>
    %15 = vector.extract_strided_slice %11 {offsets = [0, 1, 0], sizes = [40, 6, 6], strides = [1, 1, 1]} : vector<40x16x6xf32> to vector<40x6x6xf32>
    %cst_9 = arith.constant 0.00759875868 : f32
    %16 = vector.broadcast %cst_9 : f32 to vector<40x6x6xf32>
    %17 = arith.mulf %16, %15 : vector<40x6x6xf32>
    %18 = arith.addf %14, %17 : vector<40x6x6xf32>
    %19 = vector.extract_strided_slice %11 {offsets = [0, 2, 0], sizes = [40, 6, 6], strides = [1, 1, 1]} : vector<40x16x6xf32> to vector<40x6x6xf32>
    %cst_10 = arith.constant 0.0360007733 : f32
    %20 = vector.broadcast %cst_10 : f32 to vector<40x6x6xf32>
    %21 = arith.mulf %20, %19 : vector<40x6x6xf32>
    %22 = arith.addf %18, %21 : vector<40x6x6xf32>
    %23 = vector.extract_strided_slice %11 {offsets = [0, 3, 0], sizes = [40, 6, 6], strides = [1, 1, 1]} : vector<40x16x6xf32> to vector<40x6x6xf32>
    %cst_11 = arith.constant 0.109360695 : f32
    %24 = vector.broadcast %cst_11 : f32 to vector<40x6x6xf32>
    %25 = arith.mulf %24, %23 : vector<40x6x6xf32>
    %26 = arith.addf %22, %25 : vector<40x6x6xf32>
    %27 = vector.extract_strided_slice %11 {offsets = [0, 4, 0], sizes = [40, 6, 6], strides = [1, 1, 1]} : vector<40x16x6xf32> to vector<40x6x6xf32>
    %cst_12 = arith.constant 0.213005543 : f32
    %28 = vector.broadcast %cst_12 : f32 to vector<40x6x6xf32>
    %29 = arith.mulf %28, %27 : vector<40x6x6xf32>
    %30 = arith.addf %26, %29 : vector<40x6x6xf32>
    %31 = vector.extract_strided_slice %11 {offsets = [0, 5, 0], sizes = [40, 6, 6], strides = [1, 1, 1]} : vector<40x16x6xf32> to vector<40x6x6xf32>
    %cst_13 = arith.constant 0.266011745 : f32
    %32 = vector.broadcast %cst_13 : f32 to vector<40x6x6xf32>
    %33 = arith.mulf %32, %31 : vector<40x6x6xf32>
    %34 = arith.addf %30, %33 : vector<40x6x6xf32>
    %35 = vector.extract_strided_slice %11 {offsets = [0, 6, 0], sizes = [40, 6, 6], strides = [1, 1, 1]} : vector<40x16x6xf32> to vector<40x6x6xf32>
    %cst_14 = arith.constant 0.213005543 : f32
    %36 = vector.broadcast %cst_14 : f32 to vector<40x6x6xf32>
    %37 = arith.mulf %36, %35 : vector<40x6x6xf32>
    %38 = arith.addf %34, %37 : vector<40x6x6xf32>
    %39 = vector.extract_strided_slice %11 {offsets = [0, 7, 0], sizes = [40, 6, 6], strides = [1, 1, 1]} : vector<40x16x6xf32> to vector<40x6x6xf32>
    %cst_15 = arith.constant 0.109360695 : f32
    %40 = vector.broadcast %cst_15 : f32 to vector<40x6x6xf32>
    %41 = arith.mulf %40, %39 : vector<40x6x6xf32>
    %42 = arith.addf %38, %41 : vector<40x6x6xf32>
    %43 = vector.extract_strided_slice %11 {offsets = [0, 8, 0], sizes = [40, 6, 6], strides = [1, 1, 1]} : vector<40x16x6xf32> to vector<40x6x6xf32>
    %cst_16 = arith.constant 0.0360007733 : f32
    %44 = vector.broadcast %cst_16 : f32 to vector<40x6x6xf32>
    %45 = arith.mulf %44, %43 : vector<40x6x6xf32>
    %46 = arith.addf %42, %45 : vector<40x6x6xf32>
    %47 = vector.extract_strided_slice %11 {offsets = [0, 9, 0], sizes = [40, 6, 6], strides = [1, 1, 1]} : vector<40x16x6xf32> to vector<40x6x6xf32>
    %cst_17 = arith.constant 0.00759875868 : f32
    %48 = vector.broadcast %cst_17 : f32 to vector<40x6x6xf32>
    %49 = arith.mulf %48, %47 : vector<40x6x6xf32>
    %50 = arith.addf %46, %49 : vector<40x6x6xf32>
    %51 = vector.extract_strided_slice %11 {offsets = [0, 10, 0], sizes = [40, 6, 6], strides = [1, 1, 1]} : vector<40x16x6xf32> to vector<40x6x6xf32>
    %cst_18 = arith.constant 0.00102838024 : f32
    %52 = vector.broadcast %cst_18 : f32 to vector<40x6x6xf32>
    %53 = arith.mulf %52, %51 : vector<40x6x6xf32>
    %54 = arith.addf %50, %53 : vector<40x6x6xf32>
    %55 = vector.extract_strided_slice %54 {offsets = [0, 0, 0], sizes = [8, 6, 6], strides = [1, 1, 1]} : vector<40x6x6xf32> to vector<8x6x6xf32>
    %56 = vector.extract_strided_slice %54 {offsets = [8, 0, 0], sizes = [8, 6, 6], strides = [1, 1, 1]} : vector<40x6x6xf32> to vector<8x6x6xf32>
    %57 = vector.extract_strided_slice %54 {offsets = [16, 0, 0], sizes = [8, 6, 6], strides = [1, 1, 1]} : vector<40x6x6xf32> to vector<8x6x6xf32>
    %58 = vector.extract_strided_slice %54 {offsets = [24, 0, 0], sizes = [8, 6, 6], strides = [1, 1, 1]} : vector<40x6x6xf32> to vector<8x6x6xf32>
    %59 = vector.extract_strided_slice %54 {offsets = [32, 0, 0], sizes = [8, 6, 6], strides = [1, 1, 1]} : vector<40x6x6xf32> to vector<8x6x6xf32>
    %60 = arith.mulf %55, %55 : vector<8x6x6xf32>
    %61 = arith.mulf %56, %56 : vector<8x6x6xf32>
    %62 = arith.mulf %55, %56 : vector<8x6x6xf32>
    %63 = arith.subf %57, %60 : vector<8x6x6xf32>
    %64 = arith.subf %58, %61 : vector<8x6x6xf32>
    %65 = arith.subf %59, %62 : vector<8x6x6xf32>
    %cst_19 = arith.constant 2.000000e+00 : f32
    %66 = vector.broadcast %cst_19 : f32 to vector<8x6x6xf32>
    %67 = arith.mulf %66, %65 : vector<8x6x6xf32>
    %68 = vector.broadcast %1 : f32 to vector<8x6x6xf32>
    %69 = arith.addf %67, %68 : vector<8x6x6xf32>
    %70 = arith.addf %63, %64 : vector<8x6x6xf32>
    %71 = vector.broadcast %1 : f32 to vector<8x6x6xf32>
    %72 = arith.addf %70, %71 : vector<8x6x6xf32>
    %cst_20 = arith.constant 2.000000e+00 : f32
    %73 = vector.broadcast %cst_20 : f32 to vector<8x6x6xf32>
    %74 = arith.mulf %73, %62 : vector<8x6x6xf32>
    %75 = vector.broadcast %0 : f32 to vector<8x6x6xf32>
    %76 = arith.addf %74, %75 : vector<8x6x6xf32>
    %77 = arith.mulf %76, %69 : vector<8x6x6xf32>
    %78 = arith.addf %60, %61 : vector<8x6x6xf32>
    %79 = vector.broadcast %0 : f32 to vector<8x6x6xf32>
    %80 = arith.addf %78, %79 : vector<8x6x6xf32>
    %81 = arith.mulf %80, %72 : vector<8x6x6xf32>
    %82 = arith.divf %77, %81 : vector<8x6x6xf32>
    %83 = vector.shape_cast %82 : vector<8x6x6xf32> to vector<1x8x6x6xf32>
    %cst_21 = arith.constant dense<0.000000e+00> : vector<1xf32>
    %84 = vector.multi_reduction <add>, %83, %cst_21 [1, 2, 3] : vector<1x8x6x6xf32> to vector<1xf32>
    %85 = vector.shape_cast %84 : vector<1xf32> to vector<1x1x1x1xf32>
    %86 = vector.extract %85[0, 0, 0, 0] : f32 from vector<1x1x1x1xf32>
    %87 = vector.broadcast %86 : f32 to vector<1x1xf32>
    %c0_22 = arith.constant 0 : index
    %c0_23 = arith.constant 0 : index
    %88 = vector.load %arg5[%c0_22, %c0_23] : memref<1x1xf32, #tpu.memory_space<vmem>>, vector<1x1xf32>
    tpu.vector_store %arg5[%c0_22, %c0_23], %87 {strides = array<i32>} : memref<1x1xf32, #tpu.memory_space<vmem>>, vector<1x1xf32>,
    return
  }
  func.func @transform_0(%arg0: i32) -> i32 {
    %c0_i32 = arith.constant 0 : i32
    %c0_i32_0 = arith.constant 0 : i32
    return %c0_i32 : i32
  }
  func.func @transform_1(%arg0: i32) -> (i32, i32) {
    %c0_i32 = arith.constant 0 : i32
    %c0_i32_0 = arith.constant 0 : i32
    %c0_i32_1 = arith.constant 0 : i32
    return %c0_i32, %c0_i32_0 : i32, i32
  }
  func.func @transform_2(%arg0: i32) -> (i32, i32, i32) {
    %c0_i32 = arith.constant 0 : i32
    %c0_i32_0 = arith.constant 0 : i32
    %c0_i32_1 = arith.constant 0 : i32
    return %arg0, %c0_i32, %c0_i32_0 : i32, i32, i32
  }
  func.func @transform_3(%arg0: i32) -> (i32, i32, i32) {
    %c0_i32 = arith.constant 0 : i32
    %c0_i32_0 = arith.constant 0 : i32
    %c0_i32_1 = arith.constant 0 : i32
    return %arg0, %c0_i32, %c0_i32_0 : i32, i32, i32
  }
  func.func @transform_4(%arg0: i32) -> (i32, i32) {
    %c0_i32 = arith.constant 0 : i32
    %c0_i32_0 = arith.constant 0 : i32
    return %arg0, %c0_i32 : i32, i32
  }
}

</mosaic_0001>

<llo_original>
// kernel: tpu_custom_call.1
$region0: #{tpu_custom_call.1}
  #allocation0 [shape = 'u32[]', space=smem, size = 0x4, offset = 0x4, fixed_abs, tag = 'smem constant byte address 0x4 - core index']
  #allocation1 [shape = 'u32[144,128]{1,0:T(1,128)}', space=vmem, size = 0x12000, scoped, tag = 'internal scratch']
  %s0 = inlined_call_operand.vmem [shape: f32[2], index: 0, kind: input, shape index: {}]
  %s1 = inlined_call_operand.vmem [shape: f32[16,6], index: 1, kind: input, shape index: {}]
  %s2 = inlined_call_operand.hbm [shape: f32[8,16,16], index: 2, kind: input, shape index: {}]
  %s3 = inlined_call_operand.hbm [shape: f32[8,16,16], index: 3, kind: input, shape index: {}]
  %s4 = inlined_call_operand.hbm [shape: f32[1,1], index: 4, kind: output, shape index: {}]
  %s5 = sld [smem:[#allocation0]]
  $region38: #{tpu_custom_call.1} parent=0
    _
  %s7 = ssub.s32 1, %s5
  %s8 = scalar_select 0, %s7, %s5
  $region1: #{tpu_custom_call.1} parent=0
    #allocation2 [shape = 'u8[512]{0}', space=smem, size = 0x200, scoped, tag = 'input window, operand 0, single buffered']
    #allocation3 [shape = 's32[1]{0}', space=sflag, size = 0x4, scoped, tag = 'scoped memory for tpu_custom_call.1']
    #allocation4 [shape = 's32[1]{0}', space=sflag, size = 0x4, scoped, tag = 'scoped memory for tpu_custom_call.1']
    #allocation5 [shape = 's32[1]{0}', space=sflag, size = 0x4, scoped, tag = 'scoped memory for tpu_custom_call.1']
    #allocation6 [shape = 'u8[65536]{0}', space=vmem, size = 0x10000, scoped, tag = 'input window, operand 2, single buffered']
    #allocation7 [shape = 'u8[65536]{0}', space=vmem, size = 0x10000, scoped, tag = 'input window, operand 3, single buffered']
    #allocation8 [shape = 's32[1]{0}', space=sflag, size = 0x4, scoped, tag = 'scoped memory for tpu_custom_call.1']
    #allocation9 [shape = 'u8[512]{0}', space=vmem, size = 0x400, scoped, tag = 'output window, operand 0, single buffered']
    %9 = vsyncpa [#allocation5], 0
    %10 = vsyncpa [#allocation3], 0
    %11 = vsyncpa [#allocation8], 0
    %12 = vsyncpa [#allocation4], 0
    // Predicated region
    $region2: #{tpu_custom_call.1} parent=1 // pred_check
      _
    $region3: #{tpu_custom_call.1} parent=1 // pred_check_branch
      %14 = sbr.rel (0) target = $region5
    $region4: #{tpu_custom_call.1} parent=1 // pred_region
      %s16 = ssub.s32 16, 16
      %17 = vsyncadd [#allocation5], %s16
      %s19 = sshll.u32 %s0, 4
      %s20 = int_to_ptr.vmem [resolvable:$true] %s19
      %22 = dma.vmem_to_smem %s20, 16, [#allocation2], [#allocation5]
    $region5: #{tpu_custom_call.1} parent=1 // pred_fallthru
      _
    // Predicated region
    $region6: #{tpu_custom_call.1} parent=1 // pred_check
      _
    $region7: #{tpu_custom_call.1} parent=1 // pred_check_branch
      %24 = sbr.rel (0) target = $region9
    $region8: #{tpu_custom_call.1} parent=1 // pred_region
      _
    $region9: #{tpu_custom_call.1} parent=1 // pred_fallthru
      _
    // Predicated region
    $region10: #{tpu_custom_call.1} parent=1 // pred_check
      _
    $region11: #{tpu_custom_call.1} parent=1 // pred_check_branch
      %26 = sbr.rel (0) target = $region13
    $region12: #{tpu_custom_call.1} parent=1 // pred_region
      %s28 = ssub.s32 2048, 2048
      %29 = vsyncadd [#allocation3], %s28
      %s30 = sshll.u32 [#allocation6], 4
      %s31 = int_to_ptr.vmem [resolvable:$true] %s30
      %36 = dma.hbm_to_vmem [thread:$0]  %s2, 2048, %s31, [#allocation3], 128, 128, 8
    $region13: #{tpu_custom_call.1} parent=1 // pred_fallthru
      _
    // Predicated region
    $region14: #{tpu_custom_call.1} parent=1 // pred_check
      _
    $region15: #{tpu_custom_call.1} parent=1 // pred_check_branch
      %38 = sbr.rel (0) target = $region17
    $region16: #{tpu_custom_call.1} parent=1 // pred_region
      %s40 = ssub.s32 2048, 2048
      %41 = vsyncadd [#allocation8], %s40
      %s42 = sshll.u32 [#allocation7], 4
      %s43 = int_to_ptr.vmem [resolvable:$true] %s42
      %48 = dma.hbm_to_vmem [thread:$0]  %s3, 2048, %s43, [#allocation8], 128, 128, 8
    $region17: #{tpu_custom_call.1} parent=1 // pred_fallthru
      _
    // Predicated region
    $region18: #{tpu_custom_call.1} parent=1 // pred_check
      _
    $region19: #{tpu_custom_call.1} parent=1 // pred_check_branch
      %50 = sbr.rel (0) target = $region21
    $region20: #{tpu_custom_call.1} parent=1 // pred_region
      %51 = dma.done [#allocation5], 16
    $region21: #{tpu_custom_call.1} parent=1 // pred_fallthru
      _
    // Predicated region
    $region22: #{tpu_custom_call.1} parent=1 // pred_check
      _
    $region23: #{tpu_custom_call.1} parent=1 // pred_check_branch
      %53 = sbr.rel (0) target = $region25
    $region24: #{tpu_custom_call.1} parent=1 // pred_region
      %54 = dma.done [#allocation3], 2048
    $region25: #{tpu_custom_call.1} parent=1 // pred_fallthru
      _
    // Predicated region
    $region26: #{tpu_custom_call.1} parent=1 // pred_check
      _
    $region27: #{tpu_custom_call.1} parent=1 // pred_check_branch
      %56 = sbr.rel (0) target = $region29
    $region28: #{tpu_custom_call.1} parent=1 // pred_region
      %57 = dma.done [#allocation8], 2048
    $region29: #{tpu_custom_call.1} parent=1 // pred_fallthru
      _
    %58 = sfence
    %s59 = sld [smem:[#allocation2]]
    %s60 = sld [smem:[#allocation2 + $0x1]]
    %v61 = vld [vmem:[%s1] sm:$0xff]
    %v62 = vld [vmem:[%s1 + $0x8] sm:$0xff]
    %v63 = vld [vmem:[#allocation6] sm:$0xff]
    %v64 = vld [vmem:[#allocation6 + $0x8] sm:$0xff]
    %v65 = vld [vmem:[#allocation6 + $0x10] sm:$0xff]
    %v66 = vld [vmem:[#allocation6 + $0x18] sm:$0xff]
    %v67 = vld [vmem:[#allocation6 + $0x20] sm:$0xff]
    %v68 = vld [vmem:[#allocation6 + $0x28] sm:$0xff]
    %v69 = vld [vmem:[#allocation6 + $0x30] sm:$0xff]
    %v70 = vld [vmem:[#allocation6 + $0x38] sm:$0xff]
    %v71 = vld [vmem:[#allocation6 + $0x40] sm:$0xff]
    %v72 = vld [vmem:[#allocation6 + $0x48] sm:$0xff]
    %v73 = vld [vmem:[#allocation6 + $0x50] sm:$0xff]
    %v74 = vld [vmem:[#allocation6 + $0x58] sm:$0xff]
    %v75 = vld [vmem:[#allocation6 + $0x60] sm:$0xff]
    %v76 = vld [vmem:[#allocation6 + $0x68] sm:$0xff]
    %v77 = vld [vmem:[#allocation6 + $0x70] sm:$0xff]
    %v78 = vld [vmem:[#allocation6 + $0x78] sm:$0xff]
    %v79 = vld [vmem:[#allocation7] sm:$0xff]
    %v80 = vld [vmem:[#allocation7 + $0x8] sm:$0xff]
    %v81 = vld [vmem:[#allocation7 + $0x10] sm:$0xff]
    %v82 = vld [vmem:[#allocation7 + $0x18] sm:$0xff]
    %v83 = vld [vmem:[#allocation7 + $0x20] sm:$0xff]
    %v84 = vld [vmem:[#allocation7 + $0x28] sm:$0xff]
    %v85 = vld [vmem:[#allocation7 + $0x30] sm:$0xff]
    %v86 = vld [vmem:[#allocation7 + $0x38] sm:$0xff]
    %v87 = vld [vmem:[#allocation7 + $0x40] sm:$0xff]
    %v88 = vld [vmem:[#allocation7 + $0x48] sm:$0xff]
    %v89 = vld [vmem:[#allocation7 + $0x50] sm:$0xff]
    %v90 = vld [vmem:[#allocation7 + $0x58] sm:$0xff]
    %v91 = vld [vmem:[#allocation7 + $0x60] sm:$0xff]
    %v92 = vld [vmem:[#allocation7 + $0x68] sm:$0xff]
    %v93 = vld [vmem:[#allocation7 + $0x70] sm:$0xff]
    %v94 = vld [vmem:[#allocation7 + $0x78] sm:$0xff]
    %v95 = vmul.f32 %v63, %v63
    %v96 = vmul.f32 %v64, %v64
    %v97 = vmul.f32 %v65, %v65
    %v98 = vmul.f32 %v66, %v66
    %v99 = vmul.f32 %v67, %v67
    %v100 = vmul.f32 %v68, %v68
    %v101 = vmul.f32 %v69, %v69
    %v102 = vmul.f32 %v70, %v70
    %v103 = vmul.f32 %v71, %v71
    %v104 = vmul.f32 %v72, %v72
    %v105 = vmul.f32 %v73, %v73
    %v106 = vmul.f32 %v74, %v74
    %v107 = vmul.f32 %v75, %v75
    %v108 = vmul.f32 %v76, %v76
    %v109 = vmul.f32 %v77, %v77
    %v110 = vmul.f32 %v78, %v78
    %v111 = vmul.f32 %v79, %v79
    %v112 = vmul.f32 %v80, %v80
    %v113 = vmul.f32 %v81, %v81
    %v114 = vmul.f32 %v82, %v82
    %v115 = vmul.f32 %v83, %v83
    %v116 = vmul.f32 %v84, %v84
    %v117 = vmul.f32 %v85, %v85
    %v118 = vmul.f32 %v86, %v86
    %v119 = vmul.f32 %v87, %v87
    %v120 = vmul.f32 %v88, %v88
    %v121 = vmul.f32 %v89, %v89
    %v122 = vmul.f32 %v90, %v90
    %v123 = vmul.f32 %v91, %v91
    %v124 = vmul.f32 %v92, %v92
    %v125 = vmul.f32 %v93, %v93
    %v126 = vmul.f32 %v94, %v94
    %v127 = vmul.f32 %v63, %v79
    %v128 = vmul.f32 %v64, %v80
    %v129 = vmul.f32 %v65, %v81
    %v130 = vmul.f32 %v66, %v82
    %v131 = vmul.f32 %v67, %v83
    %v132 = vmul.f32 %v68, %v84
    %v133 = vmul.f32 %v69, %v85
    %v134 = vmul.f32 %v70, %v86
    %v135 = vmul.f32 %v71, %v87
    %v136 = vmul.f32 %v72, %v88
    %v137 = vmul.f32 %v73, %v89
    %v138 = vmul.f32 %v74, %v90
    %v139 = vmul.f32 %v75, %v91
    %v140 = vmul.f32 %v76, %v92
    %v141 = vmul.f32 %v77, %v93
    %v142 = vmul.f32 %v78, %v94
    %vm143 = vcmask 130048
    %v145 = vsel %vm143, %v63, 0
    %v148 = vsel %vm143, %v64, 0
    %v151 = vsel %vm143, %v65, 0
    %v154 = vsel %vm143, %v66, 0
    %v157 = vsel %vm143, %v67, 0
    %v160 = vsel %vm143, %v68, 0
    %v163 = vsel %vm143, %v69, 0
    %v166 = vsel %vm143, %v70, 0
    %v169 = vsel %vm143, %v71, 0
    %v172 = vsel %vm143, %v72, 0
    %v175 = vsel %vm143, %v73, 0
    %v178 = vsel %vm143, %v74, 0
    %v181 = vsel %vm143, %v75, 0
    %v184 = vsel %vm143, %v76, 0
    %v187 = vsel %vm143, %v77, 0
    %v190 = vsel %vm143, %v78, 0
    %v193 = vsel %vm143, %v79, 0
    %v196 = vsel %vm143, %v80, 0
    %v199 = vsel %vm143, %v81, 0
    %v202 = vsel %vm143, %v82, 0
    %v205 = vsel %vm143, %v83, 0
    %v208 = vsel %vm143, %v84, 0
    %v211 = vsel %vm143, %v85, 0
    %v214 = vsel %vm143, %v86, 0
    %v217 = vsel %vm143, %v87, 0
    %v220 = vsel %vm143, %v88, 0
    %v223 = vsel %vm143, %v89, 0
    %v226 = vsel %vm143, %v90, 0
    %v229 = vsel %vm143, %v91, 0
    %v232 = vsel %vm143, %v92, 0
    %v235 = vsel %vm143, %v93, 0
    %v238 = vsel %vm143, %v94, 0
    %v241 = vsel %vm143, %v95, 0
    %v244 = vsel %vm143, %v96, 0
    %v247 = vsel %vm143, %v97, 0
    %v250 = vsel %vm143, %v98, 0
    %v253 = vsel %vm143, %v99, 0
    %v256 = vsel %vm143, %v100, 0
    %v259 = vsel %vm143, %v101, 0
    %v262 = vsel %vm143, %v102, 0
    %v265 = vsel %vm143, %v103, 0
    %v268 = vsel %vm143, %v104, 0
    %v271 = vsel %vm143, %v105, 0
    %v274 = vsel %vm143, %v106, 0
    %v277 = vsel %vm143, %v107, 0
    %v280 = vsel %vm143, %v108, 0
    %v283 = vsel %vm143, %v109, 0
    %v286 = vsel %vm143, %v110, 0
    %v289 = vsel %vm143, %v111, 0
    %v292 = vsel %vm143, %v112, 0
    %v295 = vsel %vm143, %v113, 0
    %v298 = vsel %vm143, %v114, 0
    %v301 = vsel %vm143, %v115, 0
    %v304 = vsel %vm143, %v116, 0
    %v307 = vsel %vm143, %v117, 0
    %v310 = vsel %vm143, %v118, 0
    %v313 = vsel %vm143, %v119, 0
    %v316 = vsel %vm143, %v120, 0
    %v319 = vsel %vm143, %v121, 0
    %v322 = vsel %vm143, %v122, 0
    %v325 = vsel %vm143, %v123, 0
    %v328 = vsel %vm143, %v124, 0
    %v331 = vsel %vm143, %v125, 0
    %v334 = vsel %vm143, %v126, 0
    %v337 = vsel %vm143, %v127, 0
    %v340 = vsel %vm143, %v128, 0
    %v343 = vsel %vm143, %v129, 0
    %v346 = vsel %vm143, %v130, 0
    %v349 = vsel %vm143, %v131, 0
    %v352 = vsel %vm143, %v132, 0
    %v355 = vsel %vm143, %v133, 0
    %v358 = vsel %vm143, %v134, 0
    %v361 = vsel %vm143, %v135, 0
    %v364 = vsel %vm143, %v136, 0
    %v367 = vsel %vm143, %v137, 0
    %v370 = vsel %vm143, %v138, 0
    %v373 = vsel %vm143, %v139, 0
    %v376 = vsel %vm143, %v140, 0
    %v379 = vsel %vm143, %v141, 0
    %v382 = vsel %vm143, %v142, 0
    %384 = vmatprep.subr.mxu0 0.0
    %385 = vmatpush1.msra.mxu0 %v61
    %386 = vmatprep.subr.mxu0 0.0
    %387 = vmatpush1.msra.mxu0 %v62
    %388 = vmatprep.subr.mxu0 0.0
    %389 = vmatpush1.msra.mxu0 0.0
    %390 = vmatprep.subr.mxu0 0.0
    %391 = vmatpush1.msra.mxu0 0.0
    %392 = vmatprep.subr.mxu0 0.0
    %393 = vmatpush1.msra.mxu0 0.0
    %394 = vmatprep.subr.mxu0 0.0
    %395 = vmatpush1.msra.mxu0 0.0
    %396 = vmatprep.subr.mxu0 0.0
    %397 = vmatpush1.msra.mxu0 0.0
    %398 = vmatprep.subr.mxu0 0.0
    %399 = vmatpush1.msra.mxu0 0.0
    %400 = vmatprep.subr.mxu0 0.0
    %401 = vmatpush1.msra.mxu0 0.0
    %402 = vmatprep.subr.mxu0 0.0
    %403 = vmatpush1.msra.mxu0 0.0
    %404 = vmatprep.subr.mxu0 0.0
    %405 = vmatpush1.msra.mxu0 0.0
    %406 = vmatprep.subr.mxu0 0.0
    %407 = vmatpush1.msra.mxu0 0.0
    %408 = vmatprep.subr.mxu0 0.0
    %409 = vmatpush1.msra.mxu0 0.0
    %410 = vmatprep.subr.mxu0 0.0
    %411 = vmatpush1.msra.mxu0 0.0
    %412 = vmatprep.subr.mxu0 0.0
    %413 = vmatpush1.msra.mxu0 0.0
    %414 = vmatprep.subr.mxu0 0.0
    %415 = vmatpush1.msra.mxu0 0.0
    %416 = vmatprep.subr.mxu0 0.0
    %417 = vmatpush1.msra.mxu0 0.0
    %418 = vmatprep.subr.mxu0 0.0
    %419 = vmatpush1.msra.mxu0 0.0
    %420 = vmatprep.subr.mxu0 0.0
    %421 = vmatpush1.msra.mxu0 0.0
    %422 = vmatprep.subr.mxu0 0.0
    %423 = vmatpush1.msra.mxu0 0.0
    %424 = vmatprep.subr.mxu0 0.0
    %425 = vmatpush1.msra.mxu0 0.0
    %426 = vmatprep.subr.mxu0 0.0
    %427 = vmatpush1.msra.mxu0 0.0
    %428 = vmatprep.subr.mxu0 0.0
    %429 = vmatpush1.msra.mxu0 0.0
    %430 = vmatprep.subr.mxu0 0.0
    %431 = vmatpush1.msra.mxu0 0.0
    %432 = vmatprep.subr.mxu0 0.0
    %433 = vmatpush1.msra.mxu0 0.0
    %434 = vmatprep.subr.mxu0 0.0
    %435 = vmatpush1.msra.mxu0 0.0
    %436 = vmatprep.subr.mxu0 0.0
    %437 = vmatpush1.msra.mxu0 0.0
    %438 = vmatprep.subr.mxu0 0.0
    %439 = vmatpush1.msra.mxu0 0.0
    %440 = vmatprep.subr.mxu0 0.0
    %441 = vmatpush1.msra.mxu0 0.0
    %442 = vmatprep.subr.mxu0 0.0
    %443 = vmatpush1.msra.mxu0 0.0
    %444 = vmatprep.subr.mxu0 0.0
    %445 = vmatpush1.msra.mxu0 0.0
    %446 = vmatprep.subr.mxu0 0.0
    %447 = vmatpush1.msra.mxu0 0.0
    %448 = vmatprep.mubr.f32.mxu0 0.0
    %449 = vmatmul.mubr.f32.gmra.mrb[0].mxu0 %v145
    %v450 = vpop.f32.mrb[0].mxu0
    %v451 = vadd.f32 0.0, %v450
    %v452 = vpop.f32.mrb[0].mxu0
    %453 = vmatprep.mubr.f32.mxu0 0.0
    %454 = vmatmul.mubr.f32.gmra.mrb[0].mxu0 %v148
    %v455 = vpop.f32.mrb[0].mxu0
    %v456 = vadd.f32 0.0, %v455
    %v457 = vpop.f32.mrb[0].mxu0
    %458 = vmatprep.mubr.f32.mxu0 0.0
    %459 = vmatmul.mubr.f32.gmra.mrb[0].mxu0 %v151
    %v460 = vpop.f32.mrb[0].mxu0
    %v461 = vadd.f32 0.0, %v460
    %v462 = vpop.f32.mrb[0].mxu0
    %463 = vmatprep.mubr.f32.mxu0 0.0
    %464 = vmatmul.mubr.f32.gmra.mrb[0].mxu0 %v154
    %v465 = vpop.f32.mrb[0].mxu0
    %v466 = vadd.f32 0.0, %v465
    %v467 = vpop.f32.mrb[0].mxu0
    %468 = vmatprep.mubr.f32.mxu0 0.0
    %469 = vmatmul.mubr.f32.gmra.mrb[0].mxu0 %v157
    %v470 = vpop.f32.mrb[0].mxu0
    %v471 = vadd.f32 0.0, %v470
    %v472 = vpop.f32.mrb[0].mxu0
    %473 = vmatprep.mubr.f32.mxu0 0.0
    %474 = vmatmul.mubr.f32.gmra.mrb[0].mxu0 %v160
    %v475 = vpop.f32.mrb[0].mxu0
    %v476 = vadd.f32 0.0, %v475
    %v477 = vpop.f32.mrb[0].mxu0
    %478 = vmatprep.mubr.f32.mxu0 0.0
    %479 = vmatmul.mubr.f32.gmra.mrb[0].mxu0 %v163
    %v480 = vpop.f32.mrb[0].mxu0
    %v481 = vadd.f32 0.0, %v480
    %v482 = vpop.f32.mrb[0].mxu0
    %483 = vmatprep.mubr.f32.mxu0 0.0
    %484 = vmatmul.mubr.f32.gmra.mrb[0].mxu0 %v166
    %v485 = vpop.f32.mrb[0].mxu0
    %v486 = vadd.f32 0.0, %v485
    %v487 = vpop.f32.mrb[0].mxu0
    %488 = vmatprep.mubr.f32.mxu0 0.0
    %489 = vmatmul.mubr.f32.gmra.mrb[0].mxu0 %v169
    %v490 = vpop.f32.mrb[0].mxu0
    %v491 = vadd.f32 0.0, %v490
    %v492 = vpop.f32.mrb[0].mxu0
    %493 = vmatprep.mubr.f32.mxu0 0.0
    %494 = vmatmul.mubr.f32.gmra.mrb[0].mxu0 %v172
    %v495 = vpop.f32.mrb[0].mxu0
    %v496 = vadd.f32 0.0, %v495
    %v497 = vpop.f32.mrb[0].mxu0
    %498 = vmatprep.mubr.f32.mxu0 0.0
    %499 = vmatmul.mubr.f32.gmra.mrb[0].mxu0 %v175
    %v500 = vpop.f32.mrb[0].mxu0
    %v501 = vadd.f32 0.0, %v500
    %v502 = vpop.f32.mrb[0].mxu0
    %503 = vmatprep.mubr.f32.mxu0 0.0
    %504 = vmatmul.mubr.f32.gmra.mrb[0].mxu0 %v178
    %v505 = vpop.f32.mrb[0].mxu0
    %v506 = vadd.f32 0.0, %v505
    %v507 = vpop.f32.mrb[0].mxu0
    %508 = vmatprep.mubr.f32.mxu0 0.0
    %509 = vmatmul.mubr.f32.gmra.mrb[0].mxu0 %v181
    %v510 = vpop.f32.mrb[0].mxu0
    %v511 = vadd.f32 0.0, %v510
    %v512 = vpop.f32.mrb[0].mxu0
    %513 = vmatprep.mubr.f32.mxu0 0.0
    %514 = vmatmul.mubr.f32.gmra.mrb[0].mxu0 %v184
    %v515 = vpop.f32.mrb[0].mxu0
    %v516 = vadd.f32 0.0, %v515
    %v517 = vpop.f32.mrb[0].mxu0
    %518 = vmatprep.mubr.f32.mxu0 0.0
    %519 = vmatmul.mubr.f32.gmra.mrb[0].mxu0 %v187
    %v520 = vpop.f32.mrb[0].mxu0
    %v521 = vadd.f32 0.0, %v520
    %v522 = vpop.f32.mrb[0].mxu0
    %523 = vmatprep.mubr.f32.mxu0 0.0
    %524 = vmatmul.mubr.f32.gmra.mrb[0].mxu0 %v190
    %v525 = vpop.f32.mrb[0].mxu0
    %v526 = vadd.f32 0.0, %v525
    %v527 = vpop.f32.mrb[0].mxu0
    %528 = vmatprep.mubr.f32.mxu0 0.0
    %529 = vmatmul.mubr.f32.gmra.mrb[0].mxu0 %v193
    %v530 = vpop.f32.mrb[0].mxu0
    %v531 = vadd.f32 0.0, %v530
    %v532 = vpop.f32.mrb[0].mxu0
    %533 = vmatprep.mubr.f32.mxu0 0.0
    %534 = vmatmul.mubr.f32.gmra.mrb[0].mxu0 %v196
    %v535 = vpop.f32.mrb[0].mxu0
    %v536 = vadd.f32 0.0, %v535
    %v537 = vpop.f32.mrb[0].mxu0
    %538 = vmatprep.mubr.f32.mxu0 0.0
    %539 = vmatmul.mubr.f32.gmra.mrb[0].mxu0 %v199
    %v540 = vpop.f32.mrb[0].mxu0
    %v541 = vadd.f32 0.0, %v540
    %v542 = vpop.f32.mrb[0].mxu0
    %543 = vmatprep.mubr.f32.mxu0 0.0
    %544 = vmatmul.mubr.f32.gmra.mrb[0].mxu0 %v202
    %v545 = vpop.f32.mrb[0].mxu0
    %v546 = vadd.f32 0.0, %v545
    %v547 = vpop.f32.mrb[0].mxu0
    %548 = vmatprep.mubr.f32.mxu0 0.0
    %549 = vmatmul.mubr.f32.gmra.mrb[0].mxu0 %v205
    %v550 = vpop.f32.mrb[0].mxu0
    %v551 = vadd.f32 0.0, %v550
    %v552 = vpop.f32.mrb[0].mxu0
    %553 = vmatprep.mubr.f32.mxu0 0.0
    %554 = vmatmul.mubr.f32.gmra.mrb[0].mxu0 %v208
    %v555 = vpop.f32.mrb[0].mxu0
    %v556 = vadd.f32 0.0, %v555
    %v557 = vpop.f32.mrb[0].mxu0
    %558 = vmatprep.mubr.f32.mxu0 0.0
    %559 = vmatmul.mubr.f32.gmra.mrb[0].mxu0 %v211
    %v560 = vpop.f32.mrb[0].mxu0
    %v561 = vadd.f32 0.0, %v560
    %v562 = vpop.f32.mrb[0].mxu0
    %563 = vmatprep.mubr.f32.mxu0 0.0
    %564 = vmatmul.mubr.f32.gmra.mrb[0].mxu0 %v214
    %v565 = vpop.f32.mrb[0].mxu0
    %v566 = vadd.f32 0.0, %v565
    %v567 = vpop.f32.mrb[0].mxu0
    %568 = vmatprep.mubr.f32.mxu0 0.0
    %569 = vmatmul.mubr.f32.gmra.mrb[0].mxu0 %v217
    %v570 = vpop.f32.mrb[0].mxu0
    %v571 = vadd.f32 0.0, %v570
    %v572 = vpop.f32.mrb[0].mxu0
    %573 = vmatprep.mubr.f32.mxu0 0.0
    %574 = vmatmul.mubr.f32.gmra.mrb[0].mxu0 %v220
    %v575 = vpop.f32.mrb[0].mxu0
    %v576 = vadd.f32 0.0, %v575
    %v577 = vpop.f32.mrb[0].mxu0
    %578 = vmatprep.mubr.f32.mxu0 0.0
    %579 = vmatmul.mubr.f32.gmra.mrb[0].mxu0 %v223
    %v580 = vpop.f32.mrb[0].mxu0
    %v581 = vadd.f32 0.0, %v580
    %v582 = vpop.f32.mrb[0].mxu0
    %583 = vmatprep.mubr.f32.mxu0 0.0
    %584 = vmatmul.mubr.f32.gmra.mrb[0].mxu0 %v226
    %v585 = vpop.f32.mrb[0].mxu0
    %v586 = vadd.f32 0.0, %v585
    %v587 = vpop.f32.mrb[0].mxu0
    %588 = vmatprep.mubr.f32.mxu0 0.0
    %589 = vmatmul.mubr.f32.gmra.mrb[0].mxu0 %v229
    %v590 = vpop.f32.mrb[0].mxu0
    %v591 = vadd.f32 0.0, %v590
    %v592 = vpop.f32.mrb[0].mxu0
    %593 = vmatprep.mubr.f32.mxu0 0.0
    %594 = vmatmul.mubr.f32.gmra.mrb[0].mxu0 %v232
    %v595 = vpop.f32.mrb[0].mxu0
    %v596 = vadd.f32 0.0, %v595
    %v597 = vpop.f32.mrb[0].mxu0
    %598 = vmatprep.mubr.f32.mxu0 0.0
    %599 = vmatmul.mubr.f32.gmra.mrb[0].mxu0 %v235
    %v600 = vpop.f32.mrb[0].mxu0
    %v601 = vadd.f32 0.0, %v600
    %v602 = vpop.f32.mrb[0].mxu0
    %603 = vmatprep.mubr.f32.mxu0 0.0
    %604 = vmatmul.mubr.f32.gmra.mrb[0].mxu0 %v238
    %v605 = vpop.f32.mrb[0].mxu0
    %v606 = vadd.f32 0.0, %v605
    %v607 = vpop.f32.mrb[0].mxu0
    %608 = vmatprep.mubr.f32.mxu0 0.0
    %609 = vmatmul.mubr.f32.gmra.mrb[0].mxu0 %v241
    %v610 = vpop.f32.mrb[0].mxu0
    %v611 = vadd.f32 0.0, %v610
    %v612 = vpop.f32.mrb[0].mxu0
    %613 = vmatprep.mubr.f32.mxu0 0.0
    %614 = vmatmul.mubr.f32.gmra.mrb[0].mxu0 %v244
    %v615 = vpop.f32.mrb[0].mxu0
    %v616 = vadd.f32 0.0, %v615
    %v617 = vpop.f32.mrb[0].mxu0
    %618 = vmatprep.mubr.f32.mxu0 0.0
    %619 = vmatmul.mubr.f32.gmra.mrb[0].mxu0 %v247
    %v620 = vpop.f32.mrb[0].mxu0
    %v621 = vadd.f32 0.0, %v620
    %v622 = vpop.f32.mrb[0].mxu0
    %623 = vmatprep.mubr.f32.mxu0 0.0
    %624 = vmatmul.mubr.f32.gmra.mrb[0].mxu0 %v250
    %v625 = vpop.f32.mrb[0].mxu0
    %v626 = vadd.f32 0.0, %v625
    %v627 = vpop.f32.mrb[0].mxu0
    %628 = vmatprep.mubr.f32.mxu0 0.0
    %629 = vmatmul.mubr.f32.gmra.mrb[0].mxu0 %v253
    %v630 = vpop.f32.mrb[0].mxu0
    %v631 = vadd.f32 0.0, %v630
    %v632 = vpop.f32.mrb[0].mxu0
    %633 = vmatprep.mubr.f32.mxu0 0.0
    %634 = vmatmul.mubr.f32.gmra.mrb[0].mxu0 %v256
    %v635 = vpop.f32.mrb[0].mxu0
    %v636 = vadd.f32 0.0, %v635
    %v637 = vpop.f32.mrb[0].mxu0
    %638 = vmatprep.mubr.f32.mxu0 0.0
    %639 = vmatmul.mubr.f32.gmra.mrb[0].mxu0 %v259
    %v640 = vpop.f32.mrb[0].mxu0
    %v641 = vadd.f32 0.0, %v640
    %v642 = vpop.f32.mrb[0].mxu0
    %643 = vmatprep.mubr.f32.mxu0 0.0
    %644 = vmatmul.mubr.f32.gmra.mrb[0].mxu0 %v262
    %v645 = vpop.f32.mrb[0].mxu0
    %v646 = vadd.f32 0.0, %v645
    %v647 = vpop.f32.mrb[0].mxu0
    %648 = vmatprep.mubr.f32.mxu0 0.0
    %649 = vmatmul.mubr.f32.gmra.mrb[0].mxu0 %v265
    %v650 = vpop.f32.mrb[0].mxu0
    %v651 = vadd.f32 0.0, %v650
    %v652 = vpop.f32.mrb[0].mxu0
    %653 = vmatprep.mubr.f32.mxu0 0.0
    %654 = vmatmul.mubr.f32.gmra.mrb[0].mxu0 %v268
    %v655 = vpop.f32.mrb[0].mxu0
    %v656 = vadd.f32 0.0, %v655
    %v657 = vpop.f32.mrb[0].mxu0
    %658 = vmatprep.mubr.f32.mxu0 0.0
    %659 = vmatmul.mubr.f32.gmra.mrb[0].mxu0 %v271
    %v660 = vpop.f32.mrb[0].mxu0
    %v661 = vadd.f32 0.0, %v660
    %v662 = vpop.f32.mrb[0].mxu0
    %663 = vmatprep.mubr.f32.mxu0 0.0
    %664 = vmatmul.mubr.f32.gmra.mrb[0].mxu0 %v274
    %v665 = vpop.f32.mrb[0].mxu0
    %v666 = vadd.f32 0.0, %v665
    %v667 = vpop.f32.mrb[0].mxu0
    %668 = vmatprep.mubr.f32.mxu0 0.0
    %669 = vmatmul.mubr.f32.gmra.mrb[0].mxu0 %v277
    %v670 = vpop.f32.mrb[0].mxu0
    %v671 = vadd.f32 0.0, %v670
    %v672 = vpop.f32.mrb[0].mxu0
    %673 = vmatprep.mubr.f32.mxu0 0.0
    %674 = vmatmul.mubr.f32.gmra.mrb[0].mxu0 %v280
    %v675 = vpop.f32.mrb[0].mxu0
    %v676 = vadd.f32 0.0, %v675
    %v677 = vpop.f32.mrb[0].mxu0
    %678 = vmatprep.mubr.f32.mxu0 0.0
    %679 = vmatmul.mubr.f32.gmra.mrb[0].mxu0 %v283
    %v680 = vpop.f32.mrb[0].mxu0
    %v681 = vadd.f32 0.0, %v680
    %v682 = vpop.f32.mrb[0].mxu0
    %683 = vmatprep.mubr.f32.mxu0 0.0
    %684 = vmatmul.mubr.f32.gmra.mrb[0].mxu0 %v286
    %v685 = vpop.f32.mrb[0].mxu0
    %v686 = vadd.f32 0.0, %v685
    %v687 = vpop.f32.mrb[0].mxu0
    %688 = vmatprep.mubr.f32.mxu0 0.0
    %689 = vmatmul.mubr.f32.gmra.mrb[0].mxu0 %v289
    %v690 = vpop.f32.mrb[0].mxu0
    %v691 = vadd.f32 0.0, %v690
    %v692 = vpop.f32.mrb[0].mxu0
    %693 = vmatprep.mubr.f32.mxu0 0.0
    %694 = vmatmul.mubr.f32.gmra.mrb[0].mxu0 %v292
    %v695 = vpop.f32.mrb[0].mxu0
    %v696 = vadd.f32 0.0, %v695
    %v697 = vpop.f32.mrb[0].mxu0
    %698 = vmatprep.mubr.f32.mxu0 0.0
    %699 = vmatmul.mubr.f32.gmra.mrb[0].mxu0 %v295
    %v700 = vpop.f32.mrb[0].mxu0
    %v701 = vadd.f32 0.0, %v700
    %v702 = vpop.f32.mrb[0].mxu0
    %703 = vmatprep.mubr.f32.mxu0 0.0
    %704 = vmatmul.mubr.f32.gmra.mrb[0].mxu0 %v298
    %v705 = vpop.f32.mrb[0].mxu0
    %v706 = vadd.f32 0.0, %v705
    %v707 = vpop.f32.mrb[0].mxu0
    %708 = vmatprep.mubr.f32.mxu0 0.0
    %709 = vmatmul.mubr.f32.gmra.mrb[0].mxu0 %v301
    %v710 = vpop.f32.mrb[0].mxu0
    %v711 = vadd.f32 0.0, %v710
    %v712 = vpop.f32.mrb[0].mxu0
    %713 = vmatprep.mubr.f32.mxu0 0.0
    %714 = vmatmul.mubr.f32.gmra.mrb[0].mxu0 %v304
    %v715 = vpop.f32.mrb[0].mxu0
    %v716 = vadd.f32 0.0, %v715
    %v717 = vpop.f32.mrb[0].mxu0
    %718 = vmatprep.mubr.f32.mxu0 0.0
    %719 = vmatmul.mubr.f32.gmra.mrb[0].mxu0 %v307
    %v720 = vpop.f32.mrb[0].mxu0
    %v721 = vadd.f32 0.0, %v720
    %v722 = vpop.f32.mrb[0].mxu0
    %723 = vmatprep.mubr.f32.mxu0 0.0
    %724 = vmatmul.mubr.f32.gmra.mrb[0].mxu0 %v310
    %v725 = vpop.f32.mrb[0].mxu0
    %v726 = vadd.f32 0.0, %v725
    %v727 = vpop.f32.mrb[0].mxu0
    %728 = vmatprep.mubr.f32.mxu0 0.0
    %729 = vmatmul.mubr.f32.gmra.mrb[0].mxu0 %v313
    %v730 = vpop.f32.mrb[0].mxu0
    %v731 = vadd.f32 0.0, %v730
    %v732 = vpop.f32.mrb[0].mxu0
    %733 = vmatprep.mubr.f32.mxu0 0.0
    %734 = vmatmul.mubr.f32.gmra.mrb[0].mxu0 %v316
    %v735 = vpop.f32.mrb[0].mxu0
    %v736 = vadd.f32 0.0, %v735
    %v737 = vpop.f32.mrb[0].mxu0
    %738 = vmatprep.mubr.f32.mxu0 0.0
    %739 = vmatmul.mubr.f32.gmra.mrb[0].mxu0 %v319
    %v740 = vpop.f32.mrb[0].mxu0
    %v741 = vadd.f32 0.0, %v740
    %v742 = vpop.f32.mrb[0].mxu0
    %743 = vmatprep.mubr.f32.mxu0 0.0
    %744 = vmatmul.mubr.f32.gmra.mrb[0].mxu0 %v322
    %v745 = vpop.f32.mrb[0].mxu0
    %v746 = vadd.f32 0.0, %v745
    %v747 = vpop.f32.mrb[0].mxu0
    %748 = vmatprep.mubr.f32.mxu0 0.0
    %749 = vmatmul.mubr.f32.gmra.mrb[0].mxu0 %v325
    %v750 = vpop.f32.mrb[0].mxu0
    %v751 = vadd.f32 0.0, %v750
    %v752 = vpop.f32.mrb[0].mxu0
    %753 = vmatprep.mubr.f32.mxu0 0.0
    %754 = vmatmul.mubr.f32.gmra.mrb[0].mxu0 %v328
    %v755 = vpop.f32.mrb[0].mxu0
    %v756 = vadd.f32 0.0, %v755
    %v757 = vpop.f32.mrb[0].mxu0
    %758 = vmatprep.mubr.f32.mxu0 0.0
    %759 = vmatmul.mubr.f32.gmra.mrb[0].mxu0 %v331
    %v760 = vpop.f32.mrb[0].mxu0
    %v761 = vadd.f32 0.0, %v760
    %v762 = vpop.f32.mrb[0].mxu0
    %763 = vmatprep.mubr.f32.mxu0 0.0
    %764 = vmatmul.mubr.f32.gmra.mrb[0].mxu0 %v334
    %v765 = vpop.f32.mrb[0].mxu0
    %v766 = vadd.f32 0.0, %v765
    %v767 = vpop.f32.mrb[0].mxu0
    %768 = vmatprep.mubr.f32.mxu0 0.0
    %769 = vmatmul.mubr.f32.gmra.mrb[0].mxu0 %v337
    %v770 = vpop.f32.mrb[0].mxu0
    %v771 = vadd.f32 0.0, %v770
    %v772 = vpop.f32.mrb[0].mxu0
    %773 = vmatprep.mubr.f32.mxu0 0.0
    %774 = vmatmul.mubr.f32.gmra.mrb[0].mxu0 %v340
    %v775 = vpop.f32.mrb[0].mxu0
    %v776 = vadd.f32 0.0, %v775
    %v777 = vpop.f32.mrb[0].mxu0
    %778 = vmatprep.mubr.f32.mxu0 0.0
    %779 = vmatmul.mubr.f32.gmra.mrb[0].mxu0 %v343
    %v780 = vpop.f32.mrb[0].mxu0
    %v781 = vadd.f32 0.0, %v780
    %v782 = vpop.f32.mrb[0].mxu0
    %783 = vmatprep.mubr.f32.mxu0 0.0
    %784 = vmatmul.mubr.f32.gmra.mrb[0].mxu0 %v346
    %v785 = vpop.f32.mrb[0].mxu0
    %v786 = vadd.f32 0.0, %v785
    %v787 = vpop.f32.mrb[0].mxu0
    %788 = vmatprep.mubr.f32.mxu0 0.0
    %789 = vmatmul.mubr.f32.gmra.mrb[0].mxu0 %v349
    %v790 = vpop.f32.mrb[0].mxu0
    %v791 = vadd.f32 0.0, %v790
    %v792 = vpop.f32.mrb[0].mxu0
    %793 = vmatprep.mubr.f32.mxu0 0.0
    %794 = vmatmul.mubr.f32.gmra.mrb[0].mxu0 %v352
    %v795 = vpop.f32.mrb[0].mxu0
    %v796 = vadd.f32 0.0, %v795
    %v797 = vpop.f32.mrb[0].mxu0
    %798 = vmatprep.mubr.f32.mxu0 0.0
    %799 = vmatmul.mubr.f32.gmra.mrb[0].mxu0 %v355
    %v800 = vpop.f32.mrb[0].mxu0
    %v801 = vadd.f32 0.0, %v800
    %v802 = vpop.f32.mrb[0].mxu0
    %803 = vmatprep.mubr.f32.mxu0 0.0
    %804 = vmatmul.mubr.f32.gmra.mrb[0].mxu0 %v358
    %v805 = vpop.f32.mrb[0].mxu0
    %v806 = vadd.f32 0.0, %v805
    %v807 = vpop.f32.mrb[0].mxu0
    %808 = vmatprep.mubr.f32.mxu0 0.0
    %809 = vmatmul.mubr.f32.gmra.mrb[0].mxu0 %v361
    %v810 = vpop.f32.mrb[0].mxu0
    %v811 = vadd.f32 0.0, %v810
    %v812 = vpop.f32.mrb[0].mxu0
    %813 = vmatprep.mubr.f32.mxu0 0.0
    %814 = vmatmul.mubr.f32.gmra.mrb[0].mxu0 %v364
    %v815 = vpop.f32.mrb[0].mxu0
    %v816 = vadd.f32 0.0, %v815
    %v817 = vpop.f32.mrb[0].mxu0
    %818 = vmatprep.mubr.f32.mxu0 0.0
    %819 = vmatmul.mubr.f32.gmra.mrb[0].mxu0 %v367
    %v820 = vpop.f32.mrb[0].mxu0
    %v821 = vadd.f32 0.0, %v820
    %v822 = vpop.f32.mrb[0].mxu0
    %823 = vmatprep.mubr.f32.mxu0 0.0
    %824 = vmatmul.mubr.f32.gmra.mrb[0].mxu0 %v370
    %v825 = vpop.f32.mrb[0].mxu0
    %v826 = vadd.f32 0.0, %v825
    %v827 = vpop.f32.mrb[0].mxu0
    %828 = vmatprep.mubr.f32.mxu0 0.0
    %829 = vmatmul.mubr.f32.gmra.mrb[0].mxu0 %v373
    %v830 = vpop.f32.mrb[0].mxu0
    %v831 = vadd.f32 0.0, %v830
    %v832 = vpop.f32.mrb[0].mxu0
    %833 = vmatprep.mubr.f32.mxu0 0.0
    %834 = vmatmul.mubr.f32.gmra.mrb[0].mxu0 %v376
    %v835 = vpop.f32.mrb[0].mxu0
    %v836 = vadd.f32 0.0, %v835
    %v837 = vpop.f32.mrb[0].mxu0
    %838 = vmatprep.mubr.f32.mxu0 0.0
    %839 = vmatmul.mubr.f32.gmra.mrb[0].mxu0 %v379
    %v840 = vpop.f32.mrb[0].mxu0
    %v841 = vadd.f32 0.0, %v840
    %v842 = vpop.f32.mrb[0].mxu0
    %843 = vmatprep.mubr.f32.mxu0 0.0
    %844 = vmatmul.mubr.f32.gmra.mrb[0].mxu0 %v382
    %v845 = vpop.f32.mrb[0].mxu0
    %v846 = vadd.f32 0.0, %v845
    %v847 = vpop.f32.mrb[0].mxu0
    %848 = vdwg.mxu0
    %v849 = vmul.f32 %v451, 0.0010283802
    %v850 = vmul.f32 %v461, 0.0010283802
    %v851 = vmul.f32 %v471, 0.0010283802
    %v852 = vmul.f32 %v481, 0.0010283802
    %v853 = vmul.f32 %v491, 0.0010283802
    %v854 = vmul.f32 %v501, 0.0010283802
    %v855 = vmul.f32 %v511, 0.0010283802
    %v856 = vmul.f32 %v521, 0.0010283802
    %v857 = vmul.f32 %v531, 0.0010283802
    %v858 = vmul.f32 %v541, 0.0010283802
    %v859 = vmul.f32 %v551, 0.0010283802
    %v860 = vmul.f32 %v561, 0.0010283802
    %v861 = vmul.f32 %v571, 0.0010283802
    %v862 = vmul.f32 %v581, 0.0010283802
    %v863 = vmul.f32 %v591, 0.0010283802
    %v864 = vmul.f32 %v601, 0.0010283802
    %v865 = vmul.f32 %v611, 0.0010283802
    %v866 = vmul.f32 %v621, 0.0010283802
    %v867 = vmul.f32 %v631, 0.0010283802
    %v868 = vmul.f32 %v641, 0.0010283802
    %v869 = vmul.f32 %v651, 0.0010283802
    %v870 = vmul.f32 %v661, 0.0010283802
    %v871 = vmul.f32 %v671, 0.0010283802
    %v872 = vmul.f32 %v681, 0.0010283802
    %v873 = vmul.f32 %v691, 0.0010283802
    %v874 = vmul.f32 %v701, 0.0010283802
    %v875 = vmul.f32 %v711, 0.0010283802
    %v876 = vmul.f32 %v721, 0.0010283802
    %v877 = vmul.f32 %v731, 0.0010283802
    %v878 = vmul.f32 %v741, 0.0010283802
    %v879 = vmul.f32 %v751, 0.0010283802
    %v880 = vmul.f32 %v761, 0.0010283802
    %v881 = vmul.f32 %v771, 0.0010283802
    %v882 = vmul.f32 %v781, 0.0010283802
    %v883 = vmul.f32 %v791, 0.0010283802
    %v884 = vmul.f32 %v801, 0.0010283802
    %v885 = vmul.f32 %v811, 0.0010283802
    %v886 = vmul.f32 %v821, 0.0010283802
    %v887 = vmul.f32 %v831, 0.0010283802
    %v888 = vmul.f32 %v841, 0.0010283802
    %v889 = vmul.f32 %v451, 0.0075987587
    %v890 = vmul.f32 %v461, 0.0075987587
    %v891 = vmul.f32 %v471, 0.0075987587
    %v892 = vmul.f32 %v481, 0.0075987587
    %v893 = vmul.f32 %v491, 0.0075987587
    %v894 = vmul.f32 %v501, 0.0075987587
    %v895 = vmul.f32 %v511, 0.0075987587
    %v896 = vmul.f32 %v521, 0.0075987587
    %v897 = vmul.f32 %v531, 0.0075987587
    %v898 = vmul.f32 %v541, 0.0075987587
    %v899 = vmul.f32 %v551, 0.0075987587
    %v900 = vmul.f32 %v561, 0.0075987587
    %v901 = vmul.f32 %v571, 0.0075987587
    %v902 = vmul.f32 %v581, 0.0075987587
    %v903 = vmul.f32 %v591, 0.0075987587
    %v904 = vmul.f32 %v601, 0.0075987587
    %v905 = vmul.f32 %v611, 0.0075987587
    %v906 = vmul.f32 %v621, 0.0075987587
    %v907 = vmul.f32 %v631, 0.0075987587
    %v908 = vmul.f32 %v641, 0.0075987587
    %v909 = vmul.f32 %v651, 0.0075987587
    %v910 = vmul.f32 %v661, 0.0075987587
    %v911 = vmul.f32 %v671, 0.0075987587
    %v912 = vmul.f32 %v681, 0.0075987587
    %v913 = vmul.f32 %v691, 0.0075987587
    %v914 = vmul.f32 %v701, 0.0075987587
    %v915 = vmul.f32 %v711, 0.0075987587
    %v916 = vmul.f32 %v721, 0.0075987587
    %v917 = vmul.f32 %v731, 0.0075987587
    %v918 = vmul.f32 %v741, 0.0075987587
    %v919 = vmul.f32 %v751, 0.0075987587
    %v920 = vmul.f32 %v761, 0.0075987587
    %v921 = vmul.f32 %v771, 0.0075987587
    %v922 = vmul.f32 %v781, 0.0075987587
    %v923 = vmul.f32 %v791, 0.0075987587
    %v924 = vmul.f32 %v801, 0.0075987587
    %v925 = vmul.f32 %v811, 0.0075987587
    %v926 = vmul.f32 %v821, 0.0075987587
    %v927 = vmul.f32 %v831, 0.0075987587
    %v928 = vmul.f32 %v841, 0.0075987587
    %v969 = vrot.slane %v889, 1
    %v970 = vrot.slane %v890, 1
    %v971 = vrot.slane %v891, 1
    %v972 = vrot.slane %v892, 1
    %v973 = vrot.slane %v893, 1
    %v974 = vrot.slane %v894, 1
    %v975 = vrot.slane %v895, 1
    %v976 = vrot.slane %v896, 1
    %v977 = vrot.slane %v897, 1
    %v978 = vrot.slane %v898, 1
    %v979 = vrot.slane %v899, 1
    %v980 = vrot.slane %v900, 1
    %v981 = vrot.slane %v901, 1
    %v982 = vrot.slane %v902, 1
    %v983 = vrot.slane %v903, 1
    %v984 = vrot.slane %v904, 1
    %v985 = vrot.slane %v905, 1
    %v986 = vrot.slane %v906, 1
    %v987 = vrot.slane %v907, 1
    %v988 = vrot.slane %v908, 1
    %v989 = vrot.slane %v909, 1
    %v990 = vrot.slane %v910, 1
    %v991 = vrot.slane %v911, 1
    %v992 = vrot.slane %v912, 1
    %v993 = vrot.slane %v913, 1
    %v994 = vrot.slane %v914, 1
    %v995 = vrot.slane %v915, 1
    %v996 = vrot.slane %v916, 1
    %v997 = vrot.slane %v917, 1
    %v998 = vrot.slane %v918, 1
    %v999 = vrot.slane %v919, 1
    %v1000 = vrot.slane %v920, 1
    %v1001 = vrot.slane %v921, 1
    %v1002 = vrot.slane %v922, 1
    %v1003 = vrot.slane %v923, 1
    %v1004 = vrot.slane %v924, 1
    %v1005 = vrot.slane %v925, 1
    %v1006 = vrot.slane %v926, 1
    %v1007 = vrot.slane %v927, 1
    %v1008 = vrot.slane %v928, 1
    %v1049 = vadd.f32 %v849, %v969
    %v1050 = vadd.f32 %v850, %v970
    %v1051 = vadd.f32 %v851, %v971
    %v1052 = vadd.f32 %v852, %v972
    %v1053 = vadd.f32 %v853, %v973
    %v1054 = vadd.f32 %v854, %v974
    %v1055 = vadd.f32 %v855, %v975
    %v1056 = vadd.f32 %v856, %v976
    %v1057 = vadd.f32 %v857, %v977
    %v1058 = vadd.f32 %v858, %v978
    %v1059 = vadd.f32 %v859, %v979
    %v1060 = vadd.f32 %v860, %v980
    %v1061 = vadd.f32 %v861, %v981
    %v1062 = vadd.f32 %v862, %v982
    %v1063 = vadd.f32 %v863, %v983
    %v1064 = vadd.f32 %v864, %v984
    %v1065 = vadd.f32 %v865, %v985
    %v1066 = vadd.f32 %v866, %v986
    %v1067 = vadd.f32 %v867, %v987
    %v1068 = vadd.f32 %v868, %v988
    %v1069 = vadd.f32 %v869, %v989
    %v1070 = vadd.f32 %v870, %v990
    %v1071 = vadd.f32 %v871, %v991
    %v1072 = vadd.f32 %v872, %v992
    %v1073 = vadd.f32 %v873, %v993
    %v1074 = vadd.f32 %v874, %v994
    %v1075 = vadd.f32 %v875, %v995
    %v1076 = vadd.f32 %v876, %v996
    %v1077 = vadd.f32 %v877, %v997
    %v1078 = vadd.f32 %v878, %v998
    %v1079 = vadd.f32 %v879, %v999
    %v1080 = vadd.f32 %v880, %v1000
    %v1081 = vadd.f32 %v881, %v1001
    %v1082 = vadd.f32 %v882, %v1002
    %v1083 = vadd.f32 %v883, %v1003
    %v1084 = vadd.f32 %v884, %v1004
    %v1085 = vadd.f32 %v885, %v1005
    %v1086 = vadd.f32 %v886, %v1006
    %v1087 = vadd.f32 %v887, %v1007
    %v1088 = vadd.f32 %v888, %v1008
    %v1089 = vmul.f32 %v451, 0.036000773
    %v1090 = vmul.f32 %v461, 0.036000773
    %v1091 = vmul.f32 %v471, 0.036000773
    %v1092 = vmul.f32 %v481, 0.036000773
    %v1093 = vmul.f32 %v491, 0.036000773
    %v1094 = vmul.f32 %v501, 0.036000773
    %v1095 = vmul.f32 %v511, 0.036000773
    %v1096 = vmul.f32 %v521, 0.036000773
    %v1097 = vmul.f32 %v531, 0.036000773
    %v1098 = vmul.f32 %v541, 0.036000773
    %v1099 = vmul.f32 %v551, 0.036000773
    %v1100 = vmul.f32 %v561, 0.036000773
    %v1101 = vmul.f32 %v571, 0.036000773
    %v1102 = vmul.f32 %v581, 0.036000773
    %v1103 = vmul.f32 %v591, 0.036000773
    %v1104 = vmul.f32 %v601, 0.036000773
    %v1105 = vmul.f32 %v611, 0.036000773
    %v1106 = vmul.f32 %v621, 0.036000773
    %v1107 = vmul.f32 %v631, 0.036000773
    %v1108 = vmul.f32 %v641, 0.036000773
    %v1109 = vmul.f32 %v651, 0.036000773
    %v1110 = vmul.f32 %v661, 0.036000773
    %v1111 = vmul.f32 %v671, 0.036000773
    %v1112 = vmul.f32 %v681, 0.036000773
    %v1113 = vmul.f32 %v691, 0.036000773
    %v1114 = vmul.f32 %v701, 0.036000773
    %v1115 = vmul.f32 %v711, 0.036000773
    %v1116 = vmul.f32 %v721, 0.036000773
    %v1117 = vmul.f32 %v731, 0.036000773
    %v1118 = vmul.f32 %v741, 0.036000773
    %v1119 = vmul.f32 %v751, 0.036000773
    %v1120 = vmul.f32 %v761, 0.036000773
    %v1121 = vmul.f32 %v771, 0.036000773
    %v1122 = vmul.f32 %v781, 0.036000773
    %v1123 = vmul.f32 %v791, 0.036000773
    %v1124 = vmul.f32 %v801, 0.036000773
    %v1125 = vmul.f32 %v811, 0.036000773
    %v1126 = vmul.f32 %v821, 0.036000773
    %v1127 = vmul.f32 %v831, 0.036000773
    %v1128 = vmul.f32 %v841, 0.036000773
    %v1169 = vrot.slane %v1089, 2
    %v1170 = vrot.slane %v1090, 2
    %v1171 = vrot.slane %v1091, 2
    %v1172 = vrot.slane %v1092, 2
    %v1173 = vrot.slane %v1093, 2
    %v1174 = vrot.slane %v1094, 2
    %v1175 = vrot.slane %v1095, 2
    %v1176 = vrot.slane %v1096, 2
    %v1177 = vrot.slane %v1097, 2
    %v1178 = vrot.slane %v1098, 2
    %v1179 = vrot.slane %v1099, 2
    %v1180 = vrot.slane %v1100, 2
    %v1181 = vrot.slane %v1101, 2
    %v1182 = vrot.slane %v1102, 2
    %v1183 = vrot.slane %v1103, 2
    %v1184 = vrot.slane %v1104, 2
    %v1185 = vrot.slane %v1105, 2
    %v1186 = vrot.slane %v1106, 2
    %v1187 = vrot.slane %v1107, 2
    %v1188 = vrot.slane %v1108, 2
    %v1189 = vrot.slane %v1109, 2
    %v1190 = vrot.slane %v1110, 2
    %v1191 = vrot.slane %v1111, 2
    %v1192 = vrot.slane %v1112, 2
    %v1193 = vrot.slane %v1113, 2
    %v1194 = vrot.slane %v1114, 2
    %v1195 = vrot.slane %v1115, 2
    %v1196 = vrot.slane %v1116, 2
    %v1197 = vrot.slane %v1117, 2
    %v1198 = vrot.slane %v1118, 2
    %v1199 = vrot.slane %v1119, 2
    %v1200 = vrot.slane %v1120, 2
    %v1201 = vrot.slane %v1121, 2
    %v1202 = vrot.slane %v1122, 2
    %v1203 = vrot.slane %v1123, 2
    %v1204 = vrot.slane %v1124, 2
    %v1205 = vrot.slane %v1125, 2
    %v1206 = vrot.slane %v1126, 2
    %v1207 = vrot.slane %v1127, 2
    %v1208 = vrot.slane %v1128, 2
    %v1249 = vadd.f32 %v1049, %v1169
    %v1250 = vadd.f32 %v1050, %v1170
    %v1251 = vadd.f32 %v1051, %v1171
    %v1252 = vadd.f32 %v1052, %v1172
    %v1253 = vadd.f32 %v1053, %v1173
    %v1254 = vadd.f32 %v1054, %v1174
    %v1255 = vadd.f32 %v1055, %v1175
    %v1256 = vadd.f32 %v1056, %v1176
    %v1257 = vadd.f32 %v1057, %v1177
    %v1258 = vadd.f32 %v1058, %v1178
    %v1259 = vadd.f32 %v1059, %v1179
    %v1260 = vadd.f32 %v1060, %v1180
    %v1261 = vadd.f32 %v1061, %v1181
    %v1262 = vadd.f32 %v1062, %v1182
    %v1263 = vadd.f32 %v1063, %v1183
    %v1264 = vadd.f32 %v1064, %v1184
    %v1265 = vadd.f32 %v1065, %v1185
    %v1266 = vadd.f32 %v1066, %v1186
    %v1267 = vadd.f32 %v1067, %v1187
    %v1268 = vadd.f32 %v1068, %v1188
    %v1269 = vadd.f32 %v1069, %v1189
    %v1270 = vadd.f32 %v1070, %v1190
    %v1271 = vadd.f32 %v1071, %v1191
    %v1272 = vadd.f32 %v1072, %v1192
    %v1273 = vadd.f32 %v1073, %v1193
    %v1274 = vadd.f32 %v1074, %v1194
    %v1275 = vadd.f32 %v1075, %v1195
    %v1276 = vadd.f32 %v1076, %v1196
    %v1277 = vadd.f32 %v1077, %v1197
    %v1278 = vadd.f32 %v1078, %v1198
    %v1279 = vadd.f32 %v1079, %v1199
    %v1280 = vadd.f32 %v1080, %v1200
    %v1281 = vadd.f32 %v1081, %v1201
    %v1282 = vadd.f32 %v1082, %v1202
    %v1283 = vadd.f32 %v1083, %v1203
    %v1284 = vadd.f32 %v1084, %v1204
    %v1285 = vadd.f32 %v1085, %v1205
    %v1286 = vadd.f32 %v1086, %v1206
    %v1287 = vadd.f32 %v1087, %v1207
    %v1288 = vadd.f32 %v1088, %v1208
    %v1289 = vmul.f32 %v451, 0.109360695
    %v1290 = vmul.f32 %v456, 0.109360695
    %v1291 = vmul.f32 %v461, 0.109360695
    %v1292 = vmul.f32 %v466, 0.109360695
    %v1293 = vmul.f32 %v471, 0.109360695
    %v1294 = vmul.f32 %v476, 0.109360695
    %v1295 = vmul.f32 %v481, 0.109360695
    %v1296 = vmul.f32 %v486, 0.109360695
    %v1297 = vmul.f32 %v491, 0.109360695
    %v1298 = vmul.f32 %v496, 0.109360695
    %v1299 = vmul.f32 %v501, 0.109360695
    %v1300 = vmul.f32 %v506, 0.109360695
    %v1301 = vmul.f32 %v511, 0.109360695
    %v1302 = vmul.f32 %v516, 0.109360695
    %v1303 = vmul.f32 %v521, 0.109360695
    %v1304 = vmul.f32 %v526, 0.109360695
    %v1305 = vmul.f32 %v531, 0.109360695
    %v1306 = vmul.f32 %v536, 0.109360695
    %v1307 = vmul.f32 %v541, 0.109360695
    %v1308 = vmul.f32 %v546, 0.109360695
    %v1309 = vmul.f32 %v551, 0.109360695
    %v1310 = vmul.f32 %v556, 0.109360695
    %v1311 = vmul.f32 %v561, 0.109360695
    %v1312 = vmul.f32 %v566, 0.109360695
    %v1313 = vmul.f32 %v571, 0.109360695
    %v1314 = vmul.f32 %v576, 0.109360695
    %v1315 = vmul.f32 %v581, 0.109360695
    %v1316 = vmul.f32 %v586, 0.109360695
    %v1317 = vmul.f32 %v591, 0.109360695
    %v1318 = vmul.f32 %v596, 0.109360695
    %v1319 = vmul.f32 %v601, 0.109360695
    %v1320 = vmul.f32 %v606, 0.109360695
    %v1321 = vmul.f32 %v611, 0.109360695
    %v1322 = vmul.f32 %v616, 0.109360695
    %v1323 = vmul.f32 %v621, 0.109360695
    %v1324 = vmul.f32 %v626, 0.109360695
    %v1325 = vmul.f32 %v631, 0.109360695
    %v1326 = vmul.f32 %v636, 0.109360695
    %v1327 = vmul.f32 %v641, 0.109360695
    %v1328 = vmul.f32 %v646, 0.109360695
    %v1329 = vmul.f32 %v651, 0.109360695
    %v1330 = vmul.f32 %v656, 0.109360695
    %v1331 = vmul.f32 %v661, 0.109360695
    %v1332 = vmul.f32 %v666, 0.109360695
    %v1333 = vmul.f32 %v671, 0.109360695
    %v1334 = vmul.f32 %v676, 0.109360695
    %v1335 = vmul.f32 %v681, 0.109360695
    %v1336 = vmul.f32 %v686, 0.109360695
    %v1337 = vmul.f32 %v691, 0.109360695
    %v1338 = vmul.f32 %v696, 0.109360695
    %v1339 = vmul.f32 %v701, 0.109360695
    %v1340 = vmul.f32 %v706, 0.109360695
    %v1341 = vmul.f32 %v711, 0.109360695
    %v1342 = vmul.f32 %v716, 0.109360695
    %v1343 = vmul.f32 %v721, 0.109360695
    %v1344 = vmul.f32 %v726, 0.109360695
    %v1345 = vmul.f32 %v731, 0.109360695
    %v1346 = vmul.f32 %v736, 0.109360695
    %v1347 = vmul.f32 %v741, 0.109360695
    %v1348 = vmul.f32 %v746, 0.109360695
    %v1349 = vmul.f32 %v751, 0.109360695
    %v1350 = vmul.f32 %v756, 0.109360695
    %v1351 = vmul.f32 %v761, 0.109360695
    %v1352 = vmul.f32 %v766, 0.109360695
    %v1353 = vmul.f32 %v771, 0.109360695
    %v1354 = vmul.f32 %v776, 0.109360695
    %v1355 = vmul.f32 %v781, 0.109360695
    %v1356 = vmul.f32 %v786, 0.109360695
    %v1357 = vmul.f32 %v791, 0.109360695
    %v1358 = vmul.f32 %v796, 0.109360695
    %v1359 = vmul.f32 %v801, 0.109360695
    %v1360 = vmul.f32 %v806, 0.109360695
    %v1361 = vmul.f32 %v811, 0.109360695
    %v1362 = vmul.f32 %v816, 0.109360695
    %v1363 = vmul.f32 %v821, 0.109360695
    %v1364 = vmul.f32 %v826, 0.109360695
    %v1365 = vmul.f32 %v831, 0.109360695
    %v1366 = vmul.f32 %v836, 0.109360695
    %v1367 = vmul.f32 %v841, 0.109360695
    %v1368 = vmul.f32 %v846, 0.109360695
    %vm1449 = vcmask 1044480
    %v1450 = vrot.slane %v1289, 3
    %v1451 = vrot.slane %v1290, 3
    %v1452 = vsel %vm1449, %v1450, %v1451
    %v1453 = vrot.slane %v1291, 3
    %v1454 = vrot.slane %v1292, 3
    %v1455 = vsel %vm1449, %v1453, %v1454
    %v1456 = vrot.slane %v1293, 3
    %v1457 = vrot.slane %v1294, 3
    %v1458 = vsel %vm1449, %v1456, %v1457
    %v1459 = vrot.slane %v1295, 3
    %v1460 = vrot.slane %v1296, 3
    %v1461 = vsel %vm1449, %v1459, %v1460
    %v1462 = vrot.slane %v1297, 3
    %v1463 = vrot.slane %v1298, 3
    %v1464 = vsel %vm1449, %v1462, %v1463
    %v1465 = vrot.slane %v1299, 3
    %v1466 = vrot.slane %v1300, 3
    %v1467 = vsel %vm1449, %v1465, %v1466
    %v1468 = vrot.slane %v1301, 3
    %v1469 = vrot.slane %v1302, 3
    %v1470 = vsel %vm1449, %v1468, %v1469
    %v1471 = vrot.slane %v1303, 3
    %v1472 = vrot.slane %v1304, 3
    %v1473 = vsel %vm1449, %v1471, %v1472
    %v1474 = vrot.slane %v1305, 3
    %v1475 = vrot.slane %v1306, 3
    %v1476 = vsel %vm1449, %v1474, %v1475
    %v1477 = vrot.slane %v1307, 3
    %v1478 = vrot.slane %v1308, 3
    %v1479 = vsel %vm1449, %v1477, %v1478
    %v1480 = vrot.slane %v1309, 3
    %v1481 = vrot.slane %v1310, 3
    %v1482 = vsel %vm1449, %v1480, %v1481
    %v1483 = vrot.slane %v1311, 3
    %v1484 = vrot.slane %v1312, 3
    %v1485 = vsel %vm1449, %v1483, %v1484
    %v1486 = vrot.slane %v1313, 3
    %v1487 = vrot.slane %v1314, 3
    %v1488 = vsel %vm1449, %v1486, %v1487
    %v1489 = vrot.slane %v1315, 3
    %v1490 = vrot.slane %v1316, 3
    %v1491 = vsel %vm1449, %v1489, %v1490
    %v1492 = vrot.slane %v1317, 3
    %v1493 = vrot.slane %v1318, 3
    %v1494 = vsel %vm1449, %v1492, %v1493
    %v1495 = vrot.slane %v1319, 3
    %v1496 = vrot.slane %v1320, 3
    %v1497 = vsel %vm1449, %v1495, %v1496
    %v1498 = vrot.slane %v1321, 3
    %v1499 = vrot.slane %v1322, 3
    %v1500 = vsel %vm1449, %v1498, %v1499
    %v1501 = vrot.slane %v1323, 3
    %v1502 = vrot.slane %v1324, 3
    %v1503 = vsel %vm1449, %v1501, %v1502
    %v1504 = vrot.slane %v1325, 3
    %v1505 = vrot.slane %v1326, 3
    %v1506 = vsel %vm1449, %v1504, %v1505
    %v1507 = vrot.slane %v1327, 3
    %v1508 = vrot.slane %v1328, 3
    %v1509 = vsel %vm1449, %v1507, %v1508
    %v1510 = vrot.slane %v1329, 3
    %v1511 = vrot.slane %v1330, 3
    %v1512 = vsel %vm1449, %v1510, %v1511
    %v1513 = vrot.slane %v1331, 3
    %v1514 = vrot.slane %v1332, 3
    %v1515 = vsel %vm1449, %v1513, %v1514
    %v1516 = vrot.slane %v1333, 3
    %v1517 = vrot.slane %v1334, 3
    %v1518 = vsel %vm1449, %v1516, %v1517
    %v1519 = vrot.slane %v1335, 3
    %v1520 = vrot.slane %v1336, 3
    %v1521 = vsel %vm1449, %v1519, %v1520
    %v1522 = vrot.slane %v1337, 3
    %v1523 = vrot.slane %v1338, 3
    %v1524 = vsel %vm1449, %v1522, %v1523
    %v1525 = vrot.slane %v1339, 3
    %v1526 = vrot.slane %v1340, 3
    %v1527 = vsel %vm1449, %v1525, %v1526
    %v1528 = vrot.slane %v1341, 3
    %v1529 = vrot.slane %v1342, 3
    %v1530 = vsel %vm1449, %v1528, %v1529
    %v1531 = vrot.slane %v1343, 3
    %v1532 = vrot.slane %v1344, 3
    %v1533 = vsel %vm1449, %v1531, %v1532
    %v1534 = vrot.slane %v1345, 3
    %v1535 = vrot.slane %v1346, 3
    %v1536 = vsel %vm1449, %v1534, %v1535
    %v1537 = vrot.slane %v1347, 3
    %v1538 = vrot.slane %v1348, 3
    %v1539 = vsel %vm1449, %v1537, %v1538
    %v1540 = vrot.slane %v1349, 3
    %v1541 = vrot.slane %v1350, 3
    %v1542 = vsel %vm1449, %v1540, %v1541
    %v1543 = vrot.slane %v1351, 3
    %v1544 = vrot.slane %v1352, 3
    %v1545 = vsel %vm1449, %v1543, %v1544
    %v1546 = vrot.slane %v1353, 3
    %v1547 = vrot.slane %v1354, 3
    %v1548 = vsel %vm1449, %v1546, %v1547
    %v1549 = vrot.slane %v1355, 3
    %v1550 = vrot.slane %v1356, 3
    %v1551 = vsel %vm1449, %v1549, %v1550
    %v1552 = vrot.slane %v1357, 3
    %v1553 = vrot.slane %v1358, 3
    %v1554 = vsel %vm1449, %v1552, %v1553
    %v1555 = vrot.slane %v1359, 3
    %v1556 = vrot.slane %v1360, 3
    %v1557 = vsel %vm1449, %v1555, %v1556
    %v1558 = vrot.slane %v1361, 3
    %v1559 = vrot.slane %v1362, 3
    %v1560 = vsel %vm1449, %v1558, %v1559
    %v1561 = vrot.slane %v1363, 3
    %v1562 = vrot.slane %v1364, 3
    %v1563 = vsel %vm1449, %v1561, %v1562
    %v1564 = vrot.slane %v1365, 3
    %v1565 = vrot.slane %v1366, 3
    %v1566 = vsel %vm1449, %v1564, %v1565
    %v1567 = vrot.slane %v1367, 3
    %v1568 = vrot.slane %v1368, 3
    %v1569 = vsel %vm1449, %v1567, %v1568
    %v1610 = vadd.f32 %v1249, %v1452
    %v1611 = vadd.f32 %v1250, %v1455
    %v1612 = vadd.f32 %v1251, %v1458
    %v1613 = vadd.f32 %v1252, %v1461
    %v1614 = vadd.f32 %v1253, %v1464
    %v1615 = vadd.f32 %v1254, %v1467
    %v1616 = vadd.f32 %v1255, %v1470
    %v1617 = vadd.f32 %v1256, %v1473
    %v1618 = vadd.f32 %v1257, %v1476
    %v1619 = vadd.f32 %v1258, %v1479
    %v1620 = vadd.f32 %v1259, %v1482
    %v1621 = vadd.f32 %v1260, %v1485
    %v1622 = vadd.f32 %v1261, %v1488
    %v1623 = vadd.f32 %v1262, %v1491
    %v1624 = vadd.f32 %v1263, %v1494
    %v1625 = vadd.f32 %v1264, %v1497
    %v1626 = vadd.f32 %v1265, %v1500
    %v1627 = vadd.f32 %v1266, %v1503
    %v1628 = vadd.f32 %v1267, %v1506
    %v1629 = vadd.f32 %v1268, %v1509
    %v1630 = vadd.f32 %v1269, %v1512
    %v1631 = vadd.f32 %v1270, %v1515
    %v1632 = vadd.f32 %v1271, %v1518
    %v1633 = vadd.f32 %v1272, %v1521
    %v1634 = vadd.f32 %v1273, %v1524
    %v1635 = vadd.f32 %v1274, %v1527
    %v1636 = vadd.f32 %v1275, %v1530
    %v1637 = vadd.f32 %v1276, %v1533
    %v1638 = vadd.f32 %v1277, %v1536
    %v1639 = vadd.f32 %v1278, %v1539
    %v1640 = vadd.f32 %v1279, %v1542
    %v1641 = vadd.f32 %v1280, %v1545
    %v1642 = vadd.f32 %v1281, %v1548
    %v1643 = vadd.f32 %v1282, %v1551
    %v1644 = vadd.f32 %v1283, %v1554
    %v1645 = vadd.f32 %v1284, %v1557
    %v1646 = vadd.f32 %v1285, %v1560
    %v1647 = vadd.f32 %v1286, %v1563
    %v1648 = vadd.f32 %v1287, %v1566
    %v1649 = vadd.f32 %v1288, %v1569
    %v1650 = vmul.f32 %v451, 0.21300554
    %v1651 = vmul.f32 %v456, 0.21300554
    %v1652 = vmul.f32 %v461, 0.21300554
    %v1653 = vmul.f32 %v466, 0.21300554
    %v1654 = vmul.f32 %v471, 0.21300554
    %v1655 = vmul.f32 %v476, 0.21300554
    %v1656 = vmul.f32 %v481, 0.21300554
    %v1657 = vmul.f32 %v486, 0.21300554
    %v1658 = vmul.f32 %v491, 0.21300554
    %v1659 = vmul.f32 %v496, 0.21300554
    %v1660 = vmul.f32 %v501, 0.21300554
    %v1661 = vmul.f32 %v506, 0.21300554
    %v1662 = vmul.f32 %v511, 0.21300554
    %v1663 = vmul.f32 %v516, 0.21300554
    %v1664 = vmul.f32 %v521, 0.21300554
    %v1665 = vmul.f32 %v526, 0.21300554
    %v1666 = vmul.f32 %v531, 0.21300554
    %v1667 = vmul.f32 %v536, 0.21300554
    %v1668 = vmul.f32 %v541, 0.21300554
    %v1669 = vmul.f32 %v546, 0.21300554
    %v1670 = vmul.f32 %v551, 0.21300554
    %v1671 = vmul.f32 %v556, 0.21300554
    %v1672 = vmul.f32 %v561, 0.21300554
    %v1673 = vmul.f32 %v566, 0.21300554
    %v1674 = vmul.f32 %v571, 0.21300554
    %v1675 = vmul.f32 %v576, 0.21300554
    %v1676 = vmul.f32 %v581, 0.21300554
    %v1677 = vmul.f32 %v586, 0.21300554
    %v1678 = vmul.f32 %v591, 0.21300554
    %v1679 = vmul.f32 %v596, 0.21300554
    %v1680 = vmul.f32 %v601, 0.21300554
    %v1681 = vmul.f32 %v606, 0.21300554
    %v1682 = vmul.f32 %v611, 0.21300554
    %v1683 = vmul.f32 %v616, 0.21300554
    %v1684 = vmul.f32 %v621, 0.21300554
    %v1685 = vmul.f32 %v626, 0.21300554
    %v1686 = vmul.f32 %v631, 0.21300554
    %v1687 = vmul.f32 %v636, 0.21300554
    %v1688 = vmul.f32 %v641, 0.21300554
    %v1689 = vmul.f32 %v646, 0.21300554
    %v1690 = vmul.f32 %v651, 0.21300554
    %v1691 = vmul.f32 %v656, 0.21300554
    %v1692 = vmul.f32 %v661, 0.21300554
    %v1693 = vmul.f32 %v666, 0.21300554
    %v1694 = vmul.f32 %v671, 0.21300554
    %v1695 = vmul.f32 %v676, 0.21300554
    %v1696 = vmul.f32 %v681, 0.21300554
    %v1697 = vmul.f32 %v686, 0.21300554
    %v1698 = vmul.f32 %v691, 0.21300554
    %v1699 = vmul.f32 %v696, 0.21300554
    %v1700 = vmul.f32 %v701, 0.21300554
    %v1701 = vmul.f32 %v706, 0.21300554
    %v1702 = vmul.f32 %v711, 0.21300554
    %v1703 = vmul.f32 %v716, 0.21300554
    %v1704 = vmul.f32 %v721, 0.21300554
    %v1705 = vmul.f32 %v726, 0.21300554
    %v1706 = vmul.f32 %v731, 0.21300554
    %v1707 = vmul.f32 %v736, 0.21300554
    %v1708 = vmul.f32 %v741, 0.21300554
    %v1709 = vmul.f32 %v746, 0.21300554
    %v1710 = vmul.f32 %v751, 0.21300554
    %v1711 = vmul.f32 %v756, 0.21300554
    %v1712 = vmul.f32 %v761, 0.21300554
    %v1713 = vmul.f32 %v766, 0.21300554
    %v1714 = vmul.f32 %v771, 0.21300554
    %v1715 = vmul.f32 %v776, 0.21300554
    %v1716 = vmul.f32 %v781, 0.21300554
    %v1717 = vmul.f32 %v786, 0.21300554
    %v1718 = vmul.f32 %v791, 0.21300554
    %v1719 = vmul.f32 %v796, 0.21300554
    %v1720 = vmul.f32 %v801, 0.21300554
    %v1721 = vmul.f32 %v806, 0.21300554
    %v1722 = vmul.f32 %v811, 0.21300554
    %v1723 = vmul.f32 %v816, 0.21300554
    %v1724 = vmul.f32 %v821, 0.21300554
    %v1725 = vmul.f32 %v826, 0.21300554
    %v1726 = vmul.f32 %v831, 0.21300554
    %v1727 = vmul.f32 %v836, 0.21300554
    %v1728 = vmul.f32 %v841, 0.21300554
    %v1729 = vmul.f32 %v846, 0.21300554
    %vm1810 = vcmask 1043456
    %v1811 = vrot.slane %v1650, 4
    %v1812 = vrot.slane %v1651, 4
    %v1813 = vsel %vm1810, %v1811, %v1812
    %v1814 = vrot.slane %v1652, 4
    %v1815 = vrot.slane %v1653, 4
    %v1816 = vsel %vm1810, %v1814, %v1815
    %v1817 = vrot.slane %v1654, 4
    %v1818 = vrot.slane %v1655, 4
    %v1819 = vsel %vm1810, %v1817, %v1818
    %v1820 = vrot.slane %v1656, 4
    %v1821 = vrot.slane %v1657, 4
    %v1822 = vsel %vm1810, %v1820, %v1821
    %v1823 = vrot.slane %v1658, 4
    %v1824 = vrot.slane %v1659, 4
    %v1825 = vsel %vm1810, %v1823, %v1824
    %v1826 = vrot.slane %v1660, 4
    %v1827 = vrot.slane %v1661, 4
    %v1828 = vsel %vm1810, %v1826, %v1827
    %v1829 = vrot.slane %v1662, 4
    %v1830 = vrot.slane %v1663, 4
    %v1831 = vsel %vm1810, %v1829, %v1830
    %v1832 = vrot.slane %v1664, 4
    %v1833 = vrot.slane %v1665, 4
    %v1834 = vsel %vm1810, %v1832, %v1833
    %v1835 = vrot.slane %v1666, 4
    %v1836 = vrot.slane %v1667, 4
    %v1837 = vsel %vm1810, %v1835, %v1836
    %v1838 = vrot.slane %v1668, 4
    %v1839 = vrot.slane %v1669, 4
    %v1840 = vsel %vm1810, %v1838, %v1839
    %v1841 = vrot.slane %v1670, 4
    %v1842 = vrot.slane %v1671, 4
    %v1843 = vsel %vm1810, %v1841, %v1842
    %v1844 = vrot.slane %v1672, 4
    %v1845 = vrot.slane %v1673, 4
    %v1846 = vsel %vm1810, %v1844, %v1845
    %v1847 = vrot.slane %v1674, 4
    %v1848 = vrot.slane %v1675, 4
    %v1849 = vsel %vm1810, %v1847, %v1848
    %v1850 = vrot.slane %v1676, 4
    %v1851 = vrot.slane %v1677, 4
    %v1852 = vsel %vm1810, %v1850, %v1851
    %v1853 = vrot.slane %v1678, 4
    %v1854 = vrot.slane %v1679, 4
    %v1855 = vsel %vm1810, %v1853, %v1854
    %v1856 = vrot.slane %v1680, 4
    %v1857 = vrot.slane %v1681, 4
    %v1858 = vsel %vm1810, %v1856, %v1857
    %v1859 = vrot.slane %v1682, 4
    %v1860 = vrot.slane %v1683, 4
    %v1861 = vsel %vm1810, %v1859, %v1860
    %v1862 = vrot.slane %v1684, 4
    %v1863 = vrot.slane %v1685, 4
    %v1864 = vsel %vm1810, %v1862, %v1863
    %v1865 = vrot.slane %v1686, 4
    %v1866 = vrot.slane %v1687, 4
    %v1867 = vsel %vm1810, %v1865, %v1866
    %v1868 = vrot.slane %v1688, 4
    %v1869 = vrot.slane %v1689, 4
    %v1870 = vsel %vm1810, %v1868, %v1869
    %v1871 = vrot.slane %v1690, 4
    %v1872 = vrot.slane %v1691, 4
    %v1873 = vsel %vm1810, %v1871, %v1872
    %v1874 = vrot.slane %v1692, 4
    %v1875 = vrot.slane %v1693, 4
    %v1876 = vsel %vm1810, %v1874, %v1875
    %v1877 = vrot.slane %v1694, 4
    %v1878 = vrot.slane %v1695, 4
    %v1879 = vsel %vm1810, %v1877, %v1878
    %v1880 = vrot.slane %v1696, 4
    %v1881 = vrot.slane %v1697, 4
    %v1882 = vsel %vm1810, %v1880, %v1881
    %v1883 = vrot.slane %v1698, 4
    %v1884 = vrot.slane %v1699, 4
    %v1885 = vsel %vm1810, %v1883, %v1884
    %v1886 = vrot.slane %v1700, 4
    %v1887 = vrot.slane %v1701, 4
    %v1888 = vsel %vm1810, %v1886, %v1887
    %v1889 = vrot.slane %v1702, 4
    %v1890 = vrot.slane %v1703, 4
    %v1891 = vsel %vm1810, %v1889, %v1890
    %v1892 = vrot.slane %v1704, 4
    %v1893 = vrot.slane %v1705, 4
    %v1894 = vsel %vm1810, %v1892, %v1893
    %v1895 = vrot.slane %v1706, 4
    %v1896 = vrot.slane %v1707, 4
    %v1897 = vsel %vm1810, %v1895, %v1896
    %v1898 = vrot.slane %v1708, 4
    %v1899 = vrot.slane %v1709, 4
    %v1900 = vsel %vm1810, %v1898, %v1899
    %v1901 = vrot.slane %v1710, 4
    %v1902 = vrot.slane %v1711, 4
    %v1903 = vsel %vm1810, %v1901, %v1902
    %v1904 = vrot.slane %v1712, 4
    %v1905 = vrot.slane %v1713, 4
    %v1906 = vsel %vm1810, %v1904, %v1905
    %v1907 = vrot.slane %v1714, 4
    %v1908 = vrot.slane %v1715, 4
    %v1909 = vsel %vm1810, %v1907, %v1908
    %v1910 = vrot.slane %v1716, 4
    %v1911 = vrot.slane %v1717, 4
    %v1912 = vsel %vm1810, %v1910, %v1911
    %v1913 = vrot.slane %v1718, 4
    %v1914 = vrot.slane %v1719, 4
    %v1915 = vsel %vm1810, %v1913, %v1914
    %v1916 = vrot.slane %v1720, 4
    %v1917 = vrot.slane %v1721, 4
    %v1918 = vsel %vm1810, %v1916, %v1917
    %v1919 = vrot.slane %v1722, 4
    %v1920 = vrot.slane %v1723, 4
    %v1921 = vsel %vm1810, %v1919, %v1920
    %v1922 = vrot.slane %v1724, 4
    %v1923 = vrot.slane %v1725, 4
    %v1924 = vsel %vm1810, %v1922, %v1923
    %v1925 = vrot.slane %v1726, 4
    %v1926 = vrot.slane %v1727, 4
    %v1927 = vsel %vm1810, %v1925, %v1926
    %v1928 = vrot.slane %v1728, 4
    %v1929 = vrot.slane %v1729, 4
    %v1930 = vsel %vm1810, %v1928, %v1929
    %v1971 = vadd.f32 %v1610, %v1813
    %v1972 = vadd.f32 %v1611, %v1816
    %v1973 = vadd.f32 %v1612, %v1819
    %v1974 = vadd.f32 %v1613, %v1822
    %v1975 = vadd.f32 %v1614, %v1825
    %v1976 = vadd.f32 %v1615, %v1828
    %v1977 = vadd.f32 %v1616, %v1831
    %v1978 = vadd.f32 %v1617, %v1834
    %v1979 = vadd.f32 %v1618, %v1837
    %v1980 = vadd.f32 %v1619, %v1840
    %v1981 = vadd.f32 %v1620, %v1843
    %v1982 = vadd.f32 %v1621, %v1846
    %v1983 = vadd.f32 %v1622, %v1849
    %v1984 = vadd.f32 %v1623, %v1852
    %v1985 = vadd.f32 %v1624, %v1855
    %v1986 = vadd.f32 %v1625, %v1858
    %v1987 = vadd.f32 %v1626, %v1861
    %v1988 = vadd.f32 %v1627, %v1864
    %v1989 = vadd.f32 %v1628, %v1867
    %v1990 = vadd.f32 %v1629, %v1870
    %v1991 = vadd.f32 %v1630, %v1873
    %v1992 = vadd.f32 %v1631, %v1876
    %v1993 = vadd.f32 %v1632, %v1879
    %v1994 = vadd.f32 %v1633, %v1882
    %v1995 = vadd.f32 %v1634, %v1885
    %v1996 = vadd.f32 %v1635, %v1888
    %v1997 = vadd.f32 %v1636, %v1891
    %v1998 = vadd.f32 %v1637, %v1894
    %v1999 = vadd.f32 %v1638, %v1897
    %v2000 = vadd.f32 %v1639, %v1900
    %v2001 = vadd.f32 %v1640, %v1903
    %v2002 = vadd.f32 %v1641, %v1906
    %v2003 = vadd.f32 %v1642, %v1909
    %v2004 = vadd.f32 %v1643, %v1912
    %v2005 = vadd.f32 %v1644, %v1915
    %v2006 = vadd.f32 %v1645, %v1918
    %v2007 = vadd.f32 %v1646, %v1921
    %v2008 = vadd.f32 %v1647, %v1924
    %v2009 = vadd.f32 %v1648, %v1927
    %v2010 = vadd.f32 %v1649, %v1930
    %v2011 = vmul.f32 %v451, 0.26601174
    %v2012 = vmul.f32 %v456, 0.26601174
    %v2013 = vmul.f32 %v461, 0.26601174
    %v2014 = vmul.f32 %v466, 0.26601174
    %v2015 = vmul.f32 %v471, 0.26601174
    %v2016 = vmul.f32 %v476, 0.26601174
    %v2017 = vmul.f32 %v481, 0.26601174
    %v2018 = vmul.f32 %v486, 0.26601174
    %v2019 = vmul.f32 %v491, 0.26601174
    %v2020 = vmul.f32 %v496, 0.26601174
    %v2021 = vmul.f32 %v501, 0.26601174
    %v2022 = vmul.f32 %v506, 0.26601174
    %v2023 = vmul.f32 %v511, 0.26601174
    %v2024 = vmul.f32 %v516, 0.26601174
    %v2025 = vmul.f32 %v521, 0.26601174
    %v2026 = vmul.f32 %v526, 0.26601174
    %v2027 = vmul.f32 %v531, 0.26601174
    %v2028 = vmul.f32 %v536, 0.26601174
    %v2029 = vmul.f32 %v541, 0.26601174
    %v2030 = vmul.f32 %v546, 0.26601174
    %v2031 = vmul.f32 %v551, 0.26601174
    %v2032 = vmul.f32 %v556, 0.26601174
    %v2033 = vmul.f32 %v561, 0.26601174
    %v2034 = vmul.f32 %v566, 0.26601174
    %v2035 = vmul.f32 %v571, 0.26601174
    %v2036 = vmul.f32 %v576, 0.26601174
    %v2037 = vmul.f32 %v581, 0.26601174
    %v2038 = vmul.f32 %v586, 0.26601174
    %v2039 = vmul.f32 %v591, 0.26601174
    %v2040 = vmul.f32 %v596, 0.26601174
    %v2041 = vmul.f32 %v601, 0.26601174
    %v2042 = vmul.f32 %v606, 0.26601174
    %v2043 = vmul.f32 %v611, 0.26601174
    %v2044 = vmul.f32 %v616, 0.26601174
    %v2045 = vmul.f32 %v621, 0.26601174
    %v2046 = vmul.f32 %v626, 0.26601174
    %v2047 = vmul.f32 %v631, 0.26601174
    %v2048 = vmul.f32 %v636, 0.26601174
    %v2049 = vmul.f32 %v641, 0.26601174
    %v2050 = vmul.f32 %v646, 0.26601174
    %v2051 = vmul.f32 %v651, 0.26601174
    %v2052 = vmul.f32 %v656, 0.26601174
    %v2053 = vmul.f32 %v661, 0.26601174
    %v2054 = vmul.f32 %v666, 0.26601174
    %v2055 = vmul.f32 %v671, 0.26601174
    %v2056 = vmul.f32 %v676, 0.26601174
    %v2057 = vmul.f32 %v681, 0.26601174
    %v2058 = vmul.f32 %v686, 0.26601174
    %v2059 = vmul.f32 %v691, 0.26601174
    %v2060 = vmul.f32 %v696, 0.26601174
    %v2061 = vmul.f32 %v701, 0.26601174
    %v2062 = vmul.f32 %v706, 0.26601174
    %v2063 = vmul.f32 %v711, 0.26601174
    %v2064 = vmul.f32 %v716, 0.26601174
    %v2065 = vmul.f32 %v721, 0.26601174
    %v2066 = vmul.f32 %v726, 0.26601174
    %v2067 = vmul.f32 %v731, 0.26601174
    %v2068 = vmul.f32 %v736, 0.26601174
    %v2069 = vmul.f32 %v741, 0.26601174
    %v2070 = vmul.f32 %v746, 0.26601174
    %v2071 = vmul.f32 %v751, 0.26601174
    %v2072 = vmul.f32 %v756, 0.26601174
    %v2073 = vmul.f32 %v761, 0.26601174
    %v2074 = vmul.f32 %v766, 0.26601174
    %v2075 = vmul.f32 %v771, 0.26601174
    %v2076 = vmul.f32 %v776, 0.26601174
    %v2077 = vmul.f32 %v781, 0.26601174
    %v2078 = vmul.f32 %v786, 0.26601174
    %v2079 = vmul.f32 %v791, 0.26601174
    %v2080 = vmul.f32 %v796, 0.26601174
    %v2081 = vmul.f32 %v801, 0.26601174
    %v2082 = vmul.f32 %v806, 0.26601174
    %v2083 = vmul.f32 %v811, 0.26601174
    %v2084 = vmul.f32 %v816, 0.26601174
    %v2085 = vmul.f32 %v821, 0.26601174
    %v2086 = vmul.f32 %v826, 0.26601174
    %v2087 = vmul.f32 %v831, 0.26601174
    %v2088 = vmul.f32 %v836, 0.26601174
    %v2089 = vmul.f32 %v841, 0.26601174
    %v2090 = vmul.f32 %v846, 0.26601174
    %vm2171 = vcmask 1042432
    %v2172 = vrot.slane %v2011, 5
    %v2173 = vrot.slane %v2012, 5
    %v2174 = vsel %vm2171, %v2172, %v2173
    %v2175 = vrot.slane %v2013, 5
    %v2176 = vrot.slane %v2014, 5
    %v2177 = vsel %vm2171, %v2175, %v2176
    %v2178 = vrot.slane %v2015, 5
    %v2179 = vrot.slane %v2016, 5
    %v2180 = vsel %vm2171, %v2178, %v2179
    %v2181 = vrot.slane %v2017, 5
    %v2182 = vrot.slane %v2018, 5
    %v2183 = vsel %vm2171, %v2181, %v2182
    %v2184 = vrot.slane %v2019, 5
    %v2185 = vrot.slane %v2020, 5
    %v2186 = vsel %vm2171, %v2184, %v2185
    %v2187 = vrot.slane %v2021, 5
    %v2188 = vrot.slane %v2022, 5
    %v2189 = vsel %vm2171, %v2187, %v2188
    %v2190 = vrot.slane %v2023, 5
    %v2191 = vrot.slane %v2024, 5
    %v2192 = vsel %vm2171, %v2190, %v2191
    %v2193 = vrot.slane %v2025, 5
    %v2194 = vrot.slane %v2026, 5
    %v2195 = vsel %vm2171, %v2193, %v2194
    %v2196 = vrot.slane %v2027, 5
    %v2197 = vrot.slane %v2028, 5
    %v2198 = vsel %vm2171, %v2196, %v2197
    %v2199 = vrot.slane %v2029, 5
    %v2200 = vrot.slane %v2030, 5
    %v2201 = vsel %vm2171, %v2199, %v2200
    %v2202 = vrot.slane %v2031, 5
    %v2203 = vrot.slane %v2032, 5
    %v2204 = vsel %vm2171, %v2202, %v2203
    %v2205 = vrot.slane %v2033, 5
    %v2206 = vrot.slane %v2034, 5
    %v2207 = vsel %vm2171, %v2205, %v2206
    %v2208 = vrot.slane %v2035, 5
    %v2209 = vrot.slane %v2036, 5
    %v2210 = vsel %vm2171, %v2208, %v2209
    %v2211 = vrot.slane %v2037, 5
    %v2212 = vrot.slane %v2038, 5
    %v2213 = vsel %vm2171, %v2211, %v2212
    %v2214 = vrot.slane %v2039, 5
    %v2215 = vrot.slane %v2040, 5
    %v2216 = vsel %vm2171, %v2214, %v2215
    %v2217 = vrot.slane %v2041, 5
    %v2218 = vrot.slane %v2042, 5
    %v2219 = vsel %vm2171, %v2217, %v2218
    %v2220 = vrot.slane %v2043, 5
    %v2221 = vrot.slane %v2044, 5
    %v2222 = vsel %vm2171, %v2220, %v2221
    %v2223 = vrot.slane %v2045, 5
    %v2224 = vrot.slane %v2046, 5
    %v2225 = vsel %vm2171, %v2223, %v2224
    %v2226 = vrot.slane %v2047, 5
    %v2227 = vrot.slane %v2048, 5
    %v2228 = vsel %vm2171, %v2226, %v2227
    %v2229 = vrot.slane %v2049, 5
    %v2230 = vrot.slane %v2050, 5
    %v2231 = vsel %vm2171, %v2229, %v2230
    %v2232 = vrot.slane %v2051, 5
    %v2233 = vrot.slane %v2052, 5
    %v2234 = vsel %vm2171, %v2232, %v2233
    %v2235 = vrot.slane %v2053, 5
    %v2236 = vrot.slane %v2054, 5
    %v2237 = vsel %vm2171, %v2235, %v2236
    %v2238 = vrot.slane %v2055, 5
    %v2239 = vrot.slane %v2056, 5
    %v2240 = vsel %vm2171, %v2238, %v2239
    %v2241 = vrot.slane %v2057, 5
    %v2242 = vrot.slane %v2058, 5
    %v2243 = vsel %vm2171, %v2241, %v2242
    %v2244 = vrot.slane %v2059, 5
    %v2245 = vrot.slane %v2060, 5
    %v2246 = vsel %vm2171, %v2244, %v2245
    %v2247 = vrot.slane %v2061, 5
    %v2248 = vrot.slane %v2062, 5
    %v2249 = vsel %vm2171, %v2247, %v2248
    %v2250 = vrot.slane %v2063, 5
    %v2251 = vrot.slane %v2064, 5
    %v2252 = vsel %vm2171, %v2250, %v2251
    %v2253 = vrot.slane %v2065, 5
    %v2254 = vrot.slane %v2066, 5
    %v2255 = vsel %vm2171, %v2253, %v2254
    %v2256 = vrot.slane %v2067, 5
    %v2257 = vrot.slane %v2068, 5
    %v2258 = vsel %vm2171, %v2256, %v2257
    %v2259 = vrot.slane %v2069, 5
    %v2260 = vrot.slane %v2070, 5
    %v2261 = vsel %vm2171, %v2259, %v2260
    %v2262 = vrot.slane %v2071, 5
    %v2263 = vrot.slane %v2072, 5
    %v2264 = vsel %vm2171, %v2262, %v2263
    %v2265 = vrot.slane %v2073, 5
    %v2266 = vrot.slane %v2074, 5
    %v2267 = vsel %vm2171, %v2265, %v2266
    %v2268 = vrot.slane %v2075, 5
    %v2269 = vrot.slane %v2076, 5
    %v2270 = vsel %vm2171, %v2268, %v2269
    %v2271 = vrot.slane %v2077, 5
    %v2272 = vrot.slane %v2078, 5
    %v2273 = vsel %vm2171, %v2271, %v2272
    %v2274 = vrot.slane %v2079, 5
    %v2275 = vrot.slane %v2080, 5
    %v2276 = vsel %vm2171, %v2274, %v2275
    %v2277 = vrot.slane %v2081, 5
    %v2278 = vrot.slane %v2082, 5
    %v2279 = vsel %vm2171, %v2277, %v2278
    %v2280 = vrot.slane %v2083, 5
    %v2281 = vrot.slane %v2084, 5
    %v2282 = vsel %vm2171, %v2280, %v2281
    %v2283 = vrot.slane %v2085, 5
    %v2284 = vrot.slane %v2086, 5
    %v2285 = vsel %vm2171, %v2283, %v2284
    %v2286 = vrot.slane %v2087, 5
    %v2287 = vrot.slane %v2088, 5
    %v2288 = vsel %vm2171, %v2286, %v2287
    %v2289 = vrot.slane %v2089, 5
    %v2290 = vrot.slane %v2090, 5
    %v2291 = vsel %vm2171, %v2289, %v2290
    %v2332 = vadd.f32 %v1971, %v2174
    %v2333 = vadd.f32 %v1972, %v2177
    %v2334 = vadd.f32 %v1973, %v2180
    %v2335 = vadd.f32 %v1974, %v2183
    %v2336 = vadd.f32 %v1975, %v2186
    %v2337 = vadd.f32 %v1976, %v2189
    %v2338 = vadd.f32 %v1977, %v2192
    %v2339 = vadd.f32 %v1978, %v2195
    %v2340 = vadd.f32 %v1979, %v2198
    %v2341 = vadd.f32 %v1980, %v2201
    %v2342 = vadd.f32 %v1981, %v2204
    %v2343 = vadd.f32 %v1982, %v2207
    %v2344 = vadd.f32 %v1983, %v2210
    %v2345 = vadd.f32 %v1984, %v2213
    %v2346 = vadd.f32 %v1985, %v2216
    %v2347 = vadd.f32 %v1986, %v2219
    %v2348 = vadd.f32 %v1987, %v2222
    %v2349 = vadd.f32 %v1988, %v2225
    %v2350 = vadd.f32 %v1989, %v2228
    %v2351 = vadd.f32 %v1990, %v2231
    %v2352 = vadd.f32 %v1991, %v2234
    %v2353 = vadd.f32 %v1992, %v2237
    %v2354 = vadd.f32 %v1993, %v2240
    %v2355 = vadd.f32 %v1994, %v2243
    %v2356 = vadd.f32 %v1995, %v2246
    %v2357 = vadd.f32 %v1996, %v2249
    %v2358 = vadd.f32 %v1997, %v2252
    %v2359 = vadd.f32 %v1998, %v2255
    %v2360 = vadd.f32 %v1999, %v2258
    %v2361 = vadd.f32 %v2000, %v2261
    %v2362 = vadd.f32 %v2001, %v2264
    %v2363 = vadd.f32 %v2002, %v2267
    %v2364 = vadd.f32 %v2003, %v2270
    %v2365 = vadd.f32 %v2004, %v2273
    %v2366 = vadd.f32 %v2005, %v2276
    %v2367 = vadd.f32 %v2006, %v2279
    %v2368 = vadd.f32 %v2007, %v2282
    %v2369 = vadd.f32 %v2008, %v2285
    %v2370 = vadd.f32 %v2009, %v2288
    %v2371 = vadd.f32 %v2010, %v2291
    %vm2372 = vcmask 1041408
    %v2373 = vrot.slane %v1650, 6
    %v2374 = vrot.slane %v1651, 6
    %v2375 = vsel %vm2372, %v2373, %v2374
    %v2376 = vrot.slane %v1652, 6
    %v2377 = vrot.slane %v1653, 6
    %v2378 = vsel %vm2372, %v2376, %v2377
    %v2379 = vrot.slane %v1654, 6
    %v2380 = vrot.slane %v1655, 6
    %v2381 = vsel %vm2372, %v2379, %v2380
    %v2382 = vrot.slane %v1656, 6
    %v2383 = vrot.slane %v1657, 6
    %v2384 = vsel %vm2372, %v2382, %v2383
    %v2385 = vrot.slane %v1658, 6
    %v2386 = vrot.slane %v1659, 6
    %v2387 = vsel %vm2372, %v2385, %v2386
    %v2388 = vrot.slane %v1660, 6
    %v2389 = vrot.slane %v1661, 6
    %v2390 = vsel %vm2372, %v2388, %v2389
    %v2391 = vrot.slane %v1662, 6
    %v2392 = vrot.slane %v1663, 6
    %v2393 = vsel %vm2372, %v2391, %v2392
    %v2394 = vrot.slane %v1664, 6
    %v2395 = vrot.slane %v1665, 6
    %v2396 = vsel %vm2372, %v2394, %v2395
    %v2397 = vrot.slane %v1666, 6
    %v2398 = vrot.slane %v1667, 6
    %v2399 = vsel %vm2372, %v2397, %v2398
    %v2400 = vrot.slane %v1668, 6
    %v2401 = vrot.slane %v1669, 6
    %v2402 = vsel %vm2372, %v2400, %v2401
    %v2403 = vrot.slane %v1670, 6
    %v2404 = vrot.slane %v1671, 6
    %v2405 = vsel %vm2372, %v2403, %v2404
    %v2406 = vrot.slane %v1672, 6
    %v2407 = vrot.slane %v1673, 6
    %v2408 = vsel %vm2372, %v2406, %v2407
    %v2409 = vrot.slane %v1674, 6
    %v2410 = vrot.slane %v1675, 6
    %v2411 = vsel %vm2372, %v2409, %v2410
    %v2412 = vrot.slane %v1676, 6
    %v2413 = vrot.slane %v1677, 6
    %v2414 = vsel %vm2372, %v2412, %v2413
    %v2415 = vrot.slane %v1678, 6
    %v2416 = vrot.slane %v1679, 6
    %v2417 = vsel %vm2372, %v2415, %v2416
    %v2418 = vrot.slane %v1680, 6
    %v2419 = vrot.slane %v1681, 6
    %v2420 = vsel %vm2372, %v2418, %v2419
    %v2421 = vrot.slane %v1682, 6
    %v2422 = vrot.slane %v1683, 6
    %v2423 = vsel %vm2372, %v2421, %v2422
    %v2424 = vrot.slane %v1684, 6
    %v2425 = vrot.slane %v1685, 6
    %v2426 = vsel %vm2372, %v2424, %v2425
    %v2427 = vrot.slane %v1686, 6
    %v2428 = vrot.slane %v1687, 6
    %v2429 = vsel %vm2372, %v2427, %v2428
    %v2430 = vrot.slane %v1688, 6
    %v2431 = vrot.slane %v1689, 6
    %v2432 = vsel %vm2372, %v2430, %v2431
    %v2433 = vrot.slane %v1690, 6
    %v2434 = vrot.slane %v1691, 6
    %v2435 = vsel %vm2372, %v2433, %v2434
    %v2436 = vrot.slane %v1692, 6
    %v2437 = vrot.slane %v1693, 6
    %v2438 = vsel %vm2372, %v2436, %v2437
    %v2439 = vrot.slane %v1694, 6
    %v2440 = vrot.slane %v1695, 6
    %v2441 = vsel %vm2372, %v2439, %v2440
    %v2442 = vrot.slane %v1696, 6
    %v2443 = vrot.slane %v1697, 6
    %v2444 = vsel %vm2372, %v2442, %v2443
    %v2445 = vrot.slane %v1698, 6
    %v2446 = vrot.slane %v1699, 6
    %v2447 = vsel %vm2372, %v2445, %v2446
    %v2448 = vrot.slane %v1700, 6
    %v2449 = vrot.slane %v1701, 6
    %v2450 = vsel %vm2372, %v2448, %v2449
    %v2451 = vrot.slane %v1702, 6
    %v2452 = vrot.slane %v1703, 6
    %v2453 = vsel %vm2372, %v2451, %v2452
    %v2454 = vrot.slane %v1704, 6
    %v2455 = vrot.slane %v1705, 6
    %v2456 = vsel %vm2372, %v2454, %v2455
    %v2457 = vrot.slane %v1706, 6
    %v2458 = vrot.slane %v1707, 6
    %v2459 = vsel %vm2372, %v2457, %v2458
    %v2460 = vrot.slane %v1708, 6
    %v2461 = vrot.slane %v1709, 6
    %v2462 = vsel %vm2372, %v2460, %v2461
    %v2463 = vrot.slane %v1710, 6
    %v2464 = vrot.slane %v1711, 6
    %v2465 = vsel %vm2372, %v2463, %v2464
    %v2466 = vrot.slane %v1712, 6
    %v2467 = vrot.slane %v1713, 6
    %v2468 = vsel %vm2372, %v2466, %v2467
    %v2469 = vrot.slane %v1714, 6
    %v2470 = vrot.slane %v1715, 6
    %v2471 = vsel %vm2372, %v2469, %v2470
    %v2472 = vrot.slane %v1716, 6
    %v2473 = vrot.slane %v1717, 6
    %v2474 = vsel %vm2372, %v2472, %v2473
    %v2475 = vrot.slane %v1718, 6
    %v2476 = vrot.slane %v1719, 6
    %v2477 = vsel %vm2372, %v2475, %v2476
    %v2478 = vrot.slane %v1720, 6
    %v2479 = vrot.slane %v1721, 6
    %v2480 = vsel %vm2372, %v2478, %v2479
    %v2481 = vrot.slane %v1722, 6
    %v2482 = vrot.slane %v1723, 6
    %v2483 = vsel %vm2372, %v2481, %v2482
    %v2484 = vrot.slane %v1724, 6
    %v2485 = vrot.slane %v1725, 6
    %v2486 = vsel %vm2372, %v2484, %v2485
    %v2487 = vrot.slane %v1726, 6
    %v2488 = vrot.slane %v1727, 6
    %v2489 = vsel %vm2372, %v2487, %v2488
    %v2490 = vrot.slane %v1728, 6
    %v2491 = vrot.slane %v1729, 6
    %v2492 = vsel %vm2372, %v2490, %v2491
    %v2533 = vadd.f32 %v2332, %v2375
    %v2534 = vadd.f32 %v2333, %v2378
    %v2535 = vadd.f32 %v2334, %v2381
    %v2536 = vadd.f32 %v2335, %v2384
    %v2537 = vadd.f32 %v2336, %v2387
    %v2538 = vadd.f32 %v2337, %v2390
    %v2539 = vadd.f32 %v2338, %v2393
    %v2540 = vadd.f32 %v2339, %v2396
    %v2541 = vadd.f32 %v2340, %v2399
    %v2542 = vadd.f32 %v2341, %v2402
    %v2543 = vadd.f32 %v2342, %v2405
    %v2544 = vadd.f32 %v2343, %v2408
    %v2545 = vadd.f32 %v2344, %v2411
    %v2546 = vadd.f32 %v2345, %v2414
    %v2547 = vadd.f32 %v2346, %v2417
    %v2548 = vadd.f32 %v2347, %v2420
    %v2549 = vadd.f32 %v2348, %v2423
    %v2550 = vadd.f32 %v2349, %v2426
    %v2551 = vadd.f32 %v2350, %v2429
    %v2552 = vadd.f32 %v2351, %v2432
    %v2553 = vadd.f32 %v2352, %v2435
    %v2554 = vadd.f32 %v2353, %v2438
    %v2555 = vadd.f32 %v2354, %v2441
    %v2556 = vadd.f32 %v2355, %v2444
    %v2557 = vadd.f32 %v2356, %v2447
    %v2558 = vadd.f32 %v2357, %v2450
    %v2559 = vadd.f32 %v2358, %v2453
    %v2560 = vadd.f32 %v2359, %v2456
    %v2561 = vadd.f32 %v2360, %v2459
    %v2562 = vadd.f32 %v2361, %v2462
    %v2563 = vadd.f32 %v2362, %v2465
    %v2564 = vadd.f32 %v2363, %v2468
    %v2565 = vadd.f32 %v2364, %v2471
    %v2566 = vadd.f32 %v2365, %v2474
    %v2567 = vadd.f32 %v2366, %v2477
    %v2568 = vadd.f32 %v2367, %v2480
    %v2569 = vadd.f32 %v2368, %v2483
    %v2570 = vadd.f32 %v2369, %v2486
    %v2571 = vadd.f32 %v2370, %v2489
    %v2572 = vadd.f32 %v2371, %v2492
    %vm2573 = vcmask 1040384
    %v2574 = vrot.slane %v1289, 7
    %v2575 = vrot.slane %v1290, 7
    %v2576 = vsel %vm2573, %v2574, %v2575
    %v2577 = vrot.slane %v1291, 7
    %v2578 = vrot.slane %v1292, 7
    %v2579 = vsel %vm2573, %v2577, %v2578
    %v2580 = vrot.slane %v1293, 7
    %v2581 = vrot.slane %v1294, 7
    %v2582 = vsel %vm2573, %v2580, %v2581
    %v2583 = vrot.slane %v1295, 7
    %v2584 = vrot.slane %v1296, 7
    %v2585 = vsel %vm2573, %v2583, %v2584
    %v2586 = vrot.slane %v1297, 7
    %v2587 = vrot.slane %v1298, 7
    %v2588 = vsel %vm2573, %v2586, %v2587
    %v2589 = vrot.slane %v1299, 7
    %v2590 = vrot.slane %v1300, 7
    %v2591 = vsel %vm2573, %v2589, %v2590
    %v2592 = vrot.slane %v1301, 7
    %v2593 = vrot.slane %v1302, 7
    %v2594 = vsel %vm2573, %v2592, %v2593
    %v2595 = vrot.slane %v1303, 7
    %v2596 = vrot.slane %v1304, 7
    %v2597 = vsel %vm2573, %v2595, %v2596
    %v2598 = vrot.slane %v1305, 7
    %v2599 = vrot.slane %v1306, 7
    %v2600 = vsel %vm2573, %v2598, %v2599
    %v2601 = vrot.slane %v1307, 7
    %v2602 = vrot.slane %v1308, 7
    %v2603 = vsel %vm2573, %v2601, %v2602
    %v2604 = vrot.slane %v1309, 7
    %v2605 = vrot.slane %v1310, 7
    %v2606 = vsel %vm2573, %v2604, %v2605
    %v2607 = vrot.slane %v1311, 7
    %v2608 = vrot.slane %v1312, 7
    %v2609 = vsel %vm2573, %v2607, %v2608
    %v2610 = vrot.slane %v1313, 7
    %v2611 = vrot.slane %v1314, 7
    %v2612 = vsel %vm2573, %v2610, %v2611
    %v2613 = vrot.slane %v1315, 7
    %v2614 = vrot.slane %v1316, 7
    %v2615 = vsel %vm2573, %v2613, %v2614
    %v2616 = vrot.slane %v1317, 7
    %v2617 = vrot.slane %v1318, 7
    %v2618 = vsel %vm2573, %v2616, %v2617
    %v2619 = vrot.slane %v1319, 7
    %v2620 = vrot.slane %v1320, 7
    %v2621 = vsel %vm2573, %v2619, %v2620
    %v2622 = vrot.slane %v1321, 7
    %v2623 = vrot.slane %v1322, 7
    %v2624 = vsel %vm2573, %v2622, %v2623
    %v2625 = vrot.slane %v1323, 7
    %v2626 = vrot.slane %v1324, 7
    %v2627 = vsel %vm2573, %v2625, %v2626
    %v2628 = vrot.slane %v1325, 7
    %v2629 = vrot.slane %v1326, 7
    %v2630 = vsel %vm2573, %v2628, %v2629
    %v2631 = vrot.slane %v1327, 7
    %v2632 = vrot.slane %v1328, 7
    %v2633 = vsel %vm2573, %v2631, %v2632
    %v2634 = vrot.slane %v1329, 7
    %v2635 = vrot.slane %v1330, 7
    %v2636 = vsel %vm2573, %v2634, %v2635
    %v2637 = vrot.slane %v1331, 7
    %v2638 = vrot.slane %v1332, 7
    %v2639 = vsel %vm2573, %v2637, %v2638
    %v2640 = vrot.slane %v1333, 7
    %v2641 = vrot.slane %v1334, 7
    %v2642 = vsel %vm2573, %v2640, %v2641
    %v2643 = vrot.slane %v1335, 7
    %v2644 = vrot.slane %v1336, 7
    %v2645 = vsel %vm2573, %v2643, %v2644
    %v2646 = vrot.slane %v1337, 7
    %v2647 = vrot.slane %v1338, 7
    %v2648 = vsel %vm2573, %v2646, %v2647
    %v2649 = vrot.slane %v1339, 7
    %v2650 = vrot.slane %v1340, 7
    %v2651 = vsel %vm2573, %v2649, %v2650
    %v2652 = vrot.slane %v1341, 7
    %v2653 = vrot.slane %v1342, 7
    %v2654 = vsel %vm2573, %v2652, %v2653
    %v2655 = vrot.slane %v1343, 7
    %v2656 = vrot.slane %v1344, 7
    %v2657 = vsel %vm2573, %v2655, %v2656
    %v2658 = vrot.slane %v1345, 7
    %v2659 = vrot.slane %v1346, 7
    %v2660 = vsel %vm2573, %v2658, %v2659
    %v2661 = vrot.slane %v1347, 7
    %v2662 = vrot.slane %v1348, 7
    %v2663 = vsel %vm2573, %v2661, %v2662
    %v2664 = vrot.slane %v1349, 7
    %v2665 = vrot.slane %v1350, 7
    %v2666 = vsel %vm2573, %v2664, %v2665
    %v2667 = vrot.slane %v1351, 7
    %v2668 = vrot.slane %v1352, 7
    %v2669 = vsel %vm2573, %v2667, %v2668
    %v2670 = vrot.slane %v1353, 7
    %v2671 = vrot.slane %v1354, 7
    %v2672 = vsel %vm2573, %v2670, %v2671
    %v2673 = vrot.slane %v1355, 7
    %v2674 = vrot.slane %v1356, 7
    %v2675 = vsel %vm2573, %v2673, %v2674
    %v2676 = vrot.slane %v1357, 7
    %v2677 = vrot.slane %v1358, 7
    %v2678 = vsel %vm2573, %v2676, %v2677
    %v2679 = vrot.slane %v1359, 7
    %v2680 = vrot.slane %v1360, 7
    %v2681 = vsel %vm2573, %v2679, %v2680
    %v2682 = vrot.slane %v1361, 7
    %v2683 = vrot.slane %v1362, 7
    %v2684 = vsel %vm2573, %v2682, %v2683
    %v2685 = vrot.slane %v1363, 7
    %v2686 = vrot.slane %v1364, 7
    %v2687 = vsel %vm2573, %v2685, %v2686
    %v2688 = vrot.slane %v1365, 7
    %v2689 = vrot.slane %v1366, 7
    %v2690 = vsel %vm2573, %v2688, %v2689
    %v2691 = vrot.slane %v1367, 7
    %v2692 = vrot.slane %v1368, 7
    %v2693 = vsel %vm2573, %v2691, %v2692
    %v2734 = vadd.f32 %v2533, %v2576
    %v2735 = vadd.f32 %v2534, %v2579
    %v2736 = vadd.f32 %v2535, %v2582
    %v2737 = vadd.f32 %v2536, %v2585
    %v2738 = vadd.f32 %v2537, %v2588
    %v2739 = vadd.f32 %v2538, %v2591
    %v2740 = vadd.f32 %v2539, %v2594
    %v2741 = vadd.f32 %v2540, %v2597
    %v2742 = vadd.f32 %v2541, %v2600
    %v2743 = vadd.f32 %v2542, %v2603
    %v2744 = vadd.f32 %v2543, %v2606
    %v2745 = vadd.f32 %v2544, %v2609
    %v2746 = vadd.f32 %v2545, %v2612
    %v2747 = vadd.f32 %v2546, %v2615
    %v2748 = vadd.f32 %v2547, %v2618
    %v2749 = vadd.f32 %v2548, %v2621
    %v2750 = vadd.f32 %v2549, %v2624
    %v2751 = vadd.f32 %v2550, %v2627
    %v2752 = vadd.f32 %v2551, %v2630
    %v2753 = vadd.f32 %v2552, %v2633
    %v2754 = vadd.f32 %v2553, %v2636
    %v2755 = vadd.f32 %v2554, %v2639
    %v2756 = vadd.f32 %v2555, %v2642
    %v2757 = vadd.f32 %v2556, %v2645
    %v2758 = vadd.f32 %v2557, %v2648
    %v2759 = vadd.f32 %v2558, %v2651
    %v2760 = vadd.f32 %v2559, %v2654
    %v2761 = vadd.f32 %v2560, %v2657
    %v2762 = vadd.f32 %v2561, %v2660
    %v2763 = vadd.f32 %v2562, %v2663
    %v2764 = vadd.f32 %v2563, %v2666
    %v2765 = vadd.f32 %v2564, %v2669
    %v2766 = vadd.f32 %v2565, %v2672
    %v2767 = vadd.f32 %v2566, %v2675
    %v2768 = vadd.f32 %v2567, %v2678
    %v2769 = vadd.f32 %v2568, %v2681
    %v2770 = vadd.f32 %v2569, %v2684
    %v2771 = vadd.f32 %v2570, %v2687
    %v2772 = vadd.f32 %v2571, %v2690
    %v2773 = vadd.f32 %v2572, %v2693
    %v2774 = vmul.f32 %v456, 0.036000773
    %v2775 = vmul.f32 %v466, 0.036000773
    %v2776 = vmul.f32 %v476, 0.036000773
    %v2777 = vmul.f32 %v486, 0.036000773
    %v2778 = vmul.f32 %v496, 0.036000773
    %v2779 = vmul.f32 %v506, 0.036000773
    %v2780 = vmul.f32 %v516, 0.036000773
    %v2781 = vmul.f32 %v526, 0.036000773
    %v2782 = vmul.f32 %v536, 0.036000773
    %v2783 = vmul.f32 %v546, 0.036000773
    %v2784 = vmul.f32 %v556, 0.036000773
    %v2785 = vmul.f32 %v566, 0.036000773
    %v2786 = vmul.f32 %v576, 0.036000773
    %v2787 = vmul.f32 %v586, 0.036000773
    %v2788 = vmul.f32 %v596, 0.036000773
    %v2789 = vmul.f32 %v606, 0.036000773
    %v2790 = vmul.f32 %v616, 0.036000773
    %v2791 = vmul.f32 %v626, 0.036000773
    %v2792 = vmul.f32 %v636, 0.036000773
    %v2793 = vmul.f32 %v646, 0.036000773
    %v2794 = vmul.f32 %v656, 0.036000773
    %v2795 = vmul.f32 %v666, 0.036000773
    %v2796 = vmul.f32 %v676, 0.036000773
    %v2797 = vmul.f32 %v686, 0.036000773
    %v2798 = vmul.f32 %v696, 0.036000773
    %v2799 = vmul.f32 %v706, 0.036000773
    %v2800 = vmul.f32 %v716, 0.036000773
    %v2801 = vmul.f32 %v726, 0.036000773
    %v2802 = vmul.f32 %v736, 0.036000773
    %v2803 = vmul.f32 %v746, 0.036000773
    %v2804 = vmul.f32 %v756, 0.036000773
    %v2805 = vmul.f32 %v766, 0.036000773
    %v2806 = vmul.f32 %v776, 0.036000773
    %v2807 = vmul.f32 %v786, 0.036000773
    %v2808 = vmul.f32 %v796, 0.036000773
    %v2809 = vmul.f32 %v806, 0.036000773
    %v2810 = vmul.f32 %v816, 0.036000773
    %v2811 = vmul.f32 %v826, 0.036000773
    %v2812 = vmul.f32 %v836, 0.036000773
    %v2813 = vmul.f32 %v846, 0.036000773
    %v2814 = vadd.f32 %v2734, %v2774
    %v2815 = vadd.f32 %v2735, %v2775
    %v2816 = vadd.f32 %v2736, %v2776
    %v2817 = vadd.f32 %v2737, %v2777
    %v2818 = vadd.f32 %v2738, %v2778
    %v2819 = vadd.f32 %v2739, %v2779
    %v2820 = vadd.f32 %v2740, %v2780
    %v2821 = vadd.f32 %v2741, %v2781
    %v2822 = vadd.f32 %v2742, %v2782
    %v2823 = vadd.f32 %v2743, %v2783
    %v2824 = vadd.f32 %v2744, %v2784
    %v2825 = vadd.f32 %v2745, %v2785
    %v2826 = vadd.f32 %v2746, %v2786
    %v2827 = vadd.f32 %v2747, %v2787
    %v2828 = vadd.f32 %v2748, %v2788
    %v2829 = vadd.f32 %v2749, %v2789
    %v2830 = vadd.f32 %v2750, %v2790
    %v2831 = vadd.f32 %v2751, %v2791
    %v2832 = vadd.f32 %v2752, %v2792
    %v2833 = vadd.f32 %v2753, %v2793
    %v2834 = vadd.f32 %v2754, %v2794
    %v2835 = vadd.f32 %v2755, %v2795
    %v2836 = vadd.f32 %v2756, %v2796
    %v2837 = vadd.f32 %v2757, %v2797
    %v2838 = vadd.f32 %v2758, %v2798
    %v2839 = vadd.f32 %v2759, %v2799
    %v2840 = vadd.f32 %v2760, %v2800
    %v2841 = vadd.f32 %v2761, %v2801
    %v2842 = vadd.f32 %v2762, %v2802
    %v2843 = vadd.f32 %v2763, %v2803
    %v2844 = vadd.f32 %v2764, %v2804
    %v2845 = vadd.f32 %v2765, %v2805
    %v2846 = vadd.f32 %v2766, %v2806
    %v2847 = vadd.f32 %v2767, %v2807
    %v2848 = vadd.f32 %v2768, %v2808
    %v2849 = vadd.f32 %v2769, %v2809
    %v2850 = vadd.f32 %v2770, %v2810
    %v2851 = vadd.f32 %v2771, %v2811
    %v2852 = vadd.f32 %v2772, %v2812
    %v2853 = vadd.f32 %v2773, %v2813
    %v2854 = vmul.f32 %v456, 0.0075987587
    %v2855 = vmul.f32 %v466, 0.0075987587
    %v2856 = vmul.f32 %v476, 0.0075987587
    %v2857 = vmul.f32 %v486, 0.0075987587
    %v2858 = vmul.f32 %v496, 0.0075987587
    %v2859 = vmul.f32 %v506, 0.0075987587
    %v2860 = vmul.f32 %v516, 0.0075987587
    %v2861 = vmul.f32 %v526, 0.0075987587
    %v2862 = vmul.f32 %v536, 0.0075987587
    %v2863 = vmul.f32 %v546, 0.0075987587
    %v2864 = vmul.f32 %v556, 0.0075987587
    %v2865 = vmul.f32 %v566, 0.0075987587
    %v2866 = vmul.f32 %v576, 0.0075987587
    %v2867 = vmul.f32 %v586, 0.0075987587
    %v2868 = vmul.f32 %v596, 0.0075987587
    %v2869 = vmul.f32 %v606, 0.0075987587
    %v2870 = vmul.f32 %v616, 0.0075987587
    %v2871 = vmul.f32 %v626, 0.0075987587
    %v2872 = vmul.f32 %v636, 0.0075987587
    %v2873 = vmul.f32 %v646, 0.0075987587
    %v2874 = vmul.f32 %v656, 0.0075987587
    %v2875 = vmul.f32 %v666, 0.0075987587
    %v2876 = vmul.f32 %v676, 0.0075987587
    %v2877 = vmul.f32 %v686, 0.0075987587
    %v2878 = vmul.f32 %v696, 0.0075987587
    %v2879 = vmul.f32 %v706, 0.0075987587
    %v2880 = vmul.f32 %v716, 0.0075987587
    %v2881 = vmul.f32 %v726, 0.0075987587
    %v2882 = vmul.f32 %v736, 0.0075987587
    %v2883 = vmul.f32 %v746, 0.0075987587
    %v2884 = vmul.f32 %v756, 0.0075987587
    %v2885 = vmul.f32 %v766, 0.0075987587
    %v2886 = vmul.f32 %v776, 0.0075987587
    %v2887 = vmul.f32 %v786, 0.0075987587
    %v2888 = vmul.f32 %v796, 0.0075987587
    %v2889 = vmul.f32 %v806, 0.0075987587
    %v2890 = vmul.f32 %v816, 0.0075987587
    %v2891 = vmul.f32 %v826, 0.0075987587
    %v2892 = vmul.f32 %v836, 0.0075987587
    %v2893 = vmul.f32 %v846, 0.0075987587
    %v2934 = vrot.slane %v2854, 1
    %v2935 = vrot.slane %v2855, 1
    %v2936 = vrot.slane %v2856, 1
    %v2937 = vrot.slane %v2857, 1
    %v2938 = vrot.slane %v2858, 1
    %v2939 = vrot.slane %v2859, 1
    %v2940 = vrot.slane %v2860, 1
    %v2941 = vrot.slane %v2861, 1
    %v2942 = vrot.slane %v2862, 1
    %v2943 = vrot.slane %v2863, 1
    %v2944 = vrot.slane %v2864, 1
    %v2945 = vrot.slane %v2865, 1
    %v2946 = vrot.slane %v2866, 1
    %v2947 = vrot.slane %v2867, 1
    %v2948 = vrot.slane %v2868, 1
    %v2949 = vrot.slane %v2869, 1
    %v2950 = vrot.slane %v2870, 1
    %v2951 = vrot.slane %v2871, 1
    %v2952 = vrot.slane %v2872, 1
    %v2953 = vrot.slane %v2873, 1
    %v2954 = vrot.slane %v2874, 1
    %v2955 = vrot.slane %v2875, 1
    %v2956 = vrot.slane %v2876, 1
    %v2957 = vrot.slane %v2877, 1
    %v2958 = vrot.slane %v2878, 1
    %v2959 = vrot.slane %v2879, 1
    %v2960 = vrot.slane %v2880, 1
    %v2961 = vrot.slane %v2881, 1
    %v2962 = vrot.slane %v2882, 1
    %v2963 = vrot.slane %v2883, 1
    %v2964 = vrot.slane %v2884, 1
    %v2965 = vrot.slane %v2885, 1
    %v2966 = vrot.slane %v2886, 1
    %v2967 = vrot.slane %v2887, 1
    %v2968 = vrot.slane %v2888, 1
    %v2969 = vrot.slane %v2889, 1
    %v2970 = vrot.slane %v2890, 1
    %v2971 = vrot.slane %v2891, 1
    %v2972 = vrot.slane %v2892, 1
    %v2973 = vrot.slane %v2893, 1
    %v3014 = vadd.f32 %v2814, %v2934
    %v3015 = vadd.f32 %v2815, %v2935
    %v3016 = vadd.f32 %v2816, %v2936
    %v3017 = vadd.f32 %v2817, %v2937
    %v3018 = vadd.f32 %v2818, %v2938
    %v3019 = vadd.f32 %v2819, %v2939
    %v3020 = vadd.f32 %v2820, %v2940
    %v3021 = vadd.f32 %v2821, %v2941
    %v3022 = vadd.f32 %v2822, %v2942
    %v3023 = vadd.f32 %v2823, %v2943
    %v3024 = vadd.f32 %v2824, %v2944
    %v3025 = vadd.f32 %v2825, %v2945
    %v3026 = vadd.f32 %v2826, %v2946
    %v3027 = vadd.f32 %v2827, %v2947
    %v3028 = vadd.f32 %v2828, %v2948
    %v3029 = vadd.f32 %v2829, %v2949
    %v3030 = vadd.f32 %v2830, %v2950
    %v3031 = vadd.f32 %v2831, %v2951
    %v3032 = vadd.f32 %v2832, %v2952
    %v3033 = vadd.f32 %v2833, %v2953
    %v3034 = vadd.f32 %v2834, %v2954
    %v3035 = vadd.f32 %v2835, %v2955
    %v3036 = vadd.f32 %v2836, %v2956
    %v3037 = vadd.f32 %v2837, %v2957
    %v3038 = vadd.f32 %v2838, %v2958
    %v3039 = vadd.f32 %v2839, %v2959
    %v3040 = vadd.f32 %v2840, %v2960
    %v3041 = vadd.f32 %v2841, %v2961
    %v3042 = vadd.f32 %v2842, %v2962
    %v3043 = vadd.f32 %v2843, %v2963
    %v3044 = vadd.f32 %v2844, %v2964
    %v3045 = vadd.f32 %v2845, %v2965
    %v3046 = vadd.f32 %v2846, %v2966
    %v3047 = vadd.f32 %v2847, %v2967
    %v3048 = vadd.f32 %v2848, %v2968
    %v3049 = vadd.f32 %v2849, %v2969
    %v3050 = vadd.f32 %v2850, %v2970
    %v3051 = vadd.f32 %v2851, %v2971
    %v3052 = vadd.f32 %v2852, %v2972
    %v3053 = vadd.f32 %v2853, %v2973
    %v3054 = vmul.f32 %v456, 0.0010283802
    %v3055 = vmul.f32 %v466, 0.0010283802
    %v3056 = vmul.f32 %v476, 0.0010283802
    %v3057 = vmul.f32 %v486, 0.0010283802
    %v3058 = vmul.f32 %v496, 0.0010283802
    %v3059 = vmul.f32 %v506, 0.0010283802
    %v3060 = vmul.f32 %v516, 0.0010283802
    %v3061 = vmul.f32 %v526, 0.0010283802
    %v3062 = vmul.f32 %v536, 0.0010283802
    %v3063 = vmul.f32 %v546, 0.0010283802
    %v3064 = vmul.f32 %v556, 0.0010283802
    %v3065 = vmul.f32 %v566, 0.0010283802
    %v3066 = vmul.f32 %v576, 0.0010283802
    %v3067 = vmul.f32 %v586, 0.0010283802
    %v3068 = vmul.f32 %v596, 0.0010283802
    %v3069 = vmul.f32 %v606, 0.0010283802
    %v3070 = vmul.f32 %v616, 0.0010283802
    %v3071 = vmul.f32 %v626, 0.0010283802
    %v3072 = vmul.f32 %v636, 0.0010283802
    %v3073 = vmul.f32 %v646, 0.0010283802
    %v3074 = vmul.f32 %v656, 0.0010283802
    %v3075 = vmul.f32 %v666, 0.0010283802
    %v3076 = vmul.f32 %v676, 0.0010283802
    %v3077 = vmul.f32 %v686, 0.0010283802
    %v3078 = vmul.f32 %v696, 0.0010283802
    %v3079 = vmul.f32 %v706, 0.0010283802
    %v3080 = vmul.f32 %v716, 0.0010283802
    %v3081 = vmul.f32 %v726, 0.0010283802
    %v3082 = vmul.f32 %v736, 0.0010283802
    %v3083 = vmul.f32 %v746, 0.0010283802
    %v3084 = vmul.f32 %v756, 0.0010283802
    %v3085 = vmul.f32 %v766, 0.0010283802
    %v3086 = vmul.f32 %v776, 0.0010283802
    %v3087 = vmul.f32 %v786, 0.0010283802
    %v3088 = vmul.f32 %v796, 0.0010283802
    %v3089 = vmul.f32 %v806, 0.0010283802
    %v3090 = vmul.f32 %v816, 0.0010283802
    %v3091 = vmul.f32 %v826, 0.0010283802
    %v3092 = vmul.f32 %v836, 0.0010283802
    %v3093 = vmul.f32 %v846, 0.0010283802
    %v3134 = vrot.slane %v3054, 2
    %v3135 = vrot.slane %v3055, 2
    %v3136 = vrot.slane %v3056, 2
    %v3137 = vrot.slane %v3057, 2
    %v3138 = vrot.slane %v3058, 2
    %v3139 = vrot.slane %v3059, 2
    %v3140 = vrot.slane %v3060, 2
    %v3141 = vrot.slane %v3061, 2
    %v3142 = vrot.slane %v3062, 2
    %v3143 = vrot.slane %v3063, 2
    %v3144 = vrot.slane %v3064, 2
    %v3145 = vrot.slane %v3065, 2
    %v3146 = vrot.slane %v3066, 2
    %v3147 = vrot.slane %v3067, 2
    %v3148 = vrot.slane %v3068, 2
    %v3149 = vrot.slane %v3069, 2
    %v3150 = vrot.slane %v3070, 2
    %v3151 = vrot.slane %v3071, 2
    %v3152 = vrot.slane %v3072, 2
    %v3153 = vrot.slane %v3073, 2
    %v3154 = vrot.slane %v3074, 2
    %v3155 = vrot.slane %v3075, 2
    %v3156 = vrot.slane %v3076, 2
    %v3157 = vrot.slane %v3077, 2
    %v3158 = vrot.slane %v3078, 2
    %v3159 = vrot.slane %v3079, 2
    %v3160 = vrot.slane %v3080, 2
    %v3161 = vrot.slane %v3081, 2
    %v3162 = vrot.slane %v3082, 2
    %v3163 = vrot.slane %v3083, 2
    %v3164 = vrot.slane %v3084, 2
    %v3165 = vrot.slane %v3085, 2
    %v3166 = vrot.slane %v3086, 2
    %v3167 = vrot.slane %v3087, 2
    %v3168 = vrot.slane %v3088, 2
    %v3169 = vrot.slane %v3089, 2
    %v3170 = vrot.slane %v3090, 2
    %v3171 = vrot.slane %v3091, 2
    %v3172 = vrot.slane %v3092, 2
    %v3173 = vrot.slane %v3093, 2
    %v3214 = vadd.f32 %v3014, %v3134
    %v3215 = vadd.f32 %v3015, %v3135
    %v3216 = vadd.f32 %v3016, %v3136
    %v3217 = vadd.f32 %v3017, %v3137
    %v3218 = vadd.f32 %v3018, %v3138
    %v3219 = vadd.f32 %v3019, %v3139
    %v3220 = vadd.f32 %v3020, %v3140
    %v3221 = vadd.f32 %v3021, %v3141
    %v3222 = vadd.f32 %v3022, %v3142
    %v3223 = vadd.f32 %v3023, %v3143
    %v3224 = vadd.f32 %v3024, %v3144
    %v3225 = vadd.f32 %v3025, %v3145
    %v3226 = vadd.f32 %v3026, %v3146
    %v3227 = vadd.f32 %v3027, %v3147
    %v3228 = vadd.f32 %v3028, %v3148
    %v3229 = vadd.f32 %v3029, %v3149
    %v3230 = vadd.f32 %v3030, %v3150
    %v3231 = vadd.f32 %v3031, %v3151
    %v3232 = vadd.f32 %v3032, %v3152
    %v3233 = vadd.f32 %v3033, %v3153
    %v3234 = vadd.f32 %v3034, %v3154
    %v3235 = vadd.f32 %v3035, %v3155
    %v3236 = vadd.f32 %v3036, %v3156
    %v3237 = vadd.f32 %v3037, %v3157
    %v3238 = vadd.f32 %v3038, %v3158
    %v3239 = vadd.f32 %v3039, %v3159
    %v3240 = vadd.f32 %v3040, %v3160
    %v3241 = vadd.f32 %v3041, %v3161
    %v3242 = vadd.f32 %v3042, %v3162
    %v3243 = vadd.f32 %v3043, %v3163
    %v3244 = vadd.f32 %v3044, %v3164
    %v3245 = vadd.f32 %v3045, %v3165
    %v3246 = vadd.f32 %v3046, %v3166
    %v3247 = vadd.f32 %v3047, %v3167
    %v3248 = vadd.f32 %v3048, %v3168
    %v3249 = vadd.f32 %v3049, %v3169
    %v3250 = vadd.f32 %v3050, %v3170
    %v3251 = vadd.f32 %v3051, %v3171
    %v3252 = vadd.f32 %v3052, %v3172
    %v3253 = vadd.f32 %v3053, %v3173
    %v3254 = vmul.f32 %v3214, %v3214
    %v3255 = vmul.f32 %v3215, %v3215
    %v3256 = vmul.f32 %v3216, %v3216
    %v3257 = vmul.f32 %v3217, %v3217
    %v3258 = vmul.f32 %v3218, %v3218
    %v3259 = vmul.f32 %v3219, %v3219
    %v3260 = vmul.f32 %v3220, %v3220
    %v3261 = vmul.f32 %v3221, %v3221
    %v3262 = vmul.f32 %v3222, %v3222
    %v3263 = vmul.f32 %v3223, %v3223
    %v3264 = vmul.f32 %v3224, %v3224
    %v3265 = vmul.f32 %v3225, %v3225
    %v3266 = vmul.f32 %v3226, %v3226
    %v3267 = vmul.f32 %v3227, %v3227
    %v3268 = vmul.f32 %v3228, %v3228
    %v3269 = vmul.f32 %v3229, %v3229
    %v3270 = vmul.f32 %v3214, %v3222
    %v3271 = vmul.f32 %v3215, %v3223
    %v3272 = vmul.f32 %v3216, %v3224
    %v3273 = vmul.f32 %v3217, %v3225
    %v3274 = vmul.f32 %v3218, %v3226
    %v3275 = vmul.f32 %v3219, %v3227
    %v3276 = vmul.f32 %v3220, %v3228
    %v3277 = vmul.f32 %v3221, %v3229
    %v3278 = vsub.f32 %v3230, %v3254
    %v3279 = vsub.f32 %v3231, %v3255
    %v3280 = vsub.f32 %v3232, %v3256
    %v3281 = vsub.f32 %v3233, %v3257
    %v3282 = vsub.f32 %v3234, %v3258
    %v3283 = vsub.f32 %v3235, %v3259
    %v3284 = vsub.f32 %v3236, %v3260
    %v3285 = vsub.f32 %v3237, %v3261
    %v3286 = vsub.f32 %v3238, %v3262
    %v3287 = vsub.f32 %v3239, %v3263
    %v3288 = vsub.f32 %v3240, %v3264
    %v3289 = vsub.f32 %v3241, %v3265
    %v3290 = vsub.f32 %v3242, %v3266
    %v3291 = vsub.f32 %v3243, %v3267
    %v3292 = vsub.f32 %v3244, %v3268
    %v3293 = vsub.f32 %v3245, %v3269
    %v3294 = vsub.f32 %v3246, %v3270
    %v3295 = vsub.f32 %v3247, %v3271
    %v3296 = vsub.f32 %v3248, %v3272
    %v3297 = vsub.f32 %v3249, %v3273
    %v3298 = vsub.f32 %v3250, %v3274
    %v3299 = vsub.f32 %v3251, %v3275
    %v3300 = vsub.f32 %v3252, %v3276
    %v3301 = vsub.f32 %v3253, %v3277
    %v3302 = vmul.f32 %v3294, 2.0
    %v3303 = vmul.f32 %v3295, 2.0
    %v3304 = vmul.f32 %v3296, 2.0
    %v3305 = vmul.f32 %v3297, 2.0
    %v3306 = vmul.f32 %v3298, 2.0
    %v3307 = vmul.f32 %v3299, 2.0
    %v3308 = vmul.f32 %v3300, 2.0
    %v3309 = vmul.f32 %v3301, 2.0
    %v3310 = vstv %s60
    %v3311 = vadd.f32 %v3302, %v3310
    %v3312 = vadd.f32 %v3303, %v3310
    %v3313 = vadd.f32 %v3304, %v3310
    %v3314 = vadd.f32 %v3305, %v3310
    %v3315 = vadd.f32 %v3306, %v3310
    %v3316 = vadd.f32 %v3307, %v3310
    %v3317 = vadd.f32 %v3308, %v3310
    %v3318 = vadd.f32 %v3309, %v3310
    %v3319 = vadd.f32 %v3278, %v3286
    %v3320 = vadd.f32 %v3279, %v3287
    %v3321 = vadd.f32 %v3280, %v3288
    %v3322 = vadd.f32 %v3281, %v3289
    %v3323 = vadd.f32 %v3282, %v3290
    %v3324 = vadd.f32 %v3283, %v3291
    %v3325 = vadd.f32 %v3284, %v3292
    %v3326 = vadd.f32 %v3285, %v3293
    %v3327 = vadd.f32 %v3319, %v3310
    %v3328 = vadd.f32 %v3320, %v3310
    %v3329 = vadd.f32 %v3321, %v3310
    %v3330 = vadd.f32 %v3322, %v3310
    %v3331 = vadd.f32 %v3323, %v3310
    %v3332 = vadd.f32 %v3324, %v3310
    %v3333 = vadd.f32 %v3325, %v3310
    %v3334 = vadd.f32 %v3326, %v3310
    %v3335 = vmul.f32 %v3270, 2.0
    %v3336 = vmul.f32 %v3271, 2.0
    %v3337 = vmul.f32 %v3272, 2.0
    %v3338 = vmul.f32 %v3273, 2.0
    %v3339 = vmul.f32 %v3274, 2.0
    %v3340 = vmul.f32 %v3275, 2.0
    %v3341 = vmul.f32 %v3276, 2.0
    %v3342 = vmul.f32 %v3277, 2.0
    %v3343 = vstv %s59
    %v3344 = vadd.f32 %v3335, %v3343
    %v3345 = vadd.f32 %v3336, %v3343
    %v3346 = vadd.f32 %v3337, %v3343
    %v3347 = vadd.f32 %v3338, %v3343
    %v3348 = vadd.f32 %v3339, %v3343
    %v3349 = vadd.f32 %v3340, %v3343
    %v3350 = vadd.f32 %v3341, %v3343
    %v3351 = vadd.f32 %v3342, %v3343
    %v3352 = vmul.f32 %v3344, %v3311
    %v3353 = vmul.f32 %v3345, %v3312
    %v3354 = vmul.f32 %v3346, %v3313
    %v3355 = vmul.f32 %v3347, %v3314
    %v3356 = vmul.f32 %v3348, %v3315
    %v3357 = vmul.f32 %v3349, %v3316
    %v3358 = vmul.f32 %v3350, %v3317
    %v3359 = vmul.f32 %v3351, %v3318
    %v3360 = vadd.f32 %v3254, %v3262
    %v3361 = vadd.f32 %v3255, %v3263
    %v3362 = vadd.f32 %v3256, %v3264
    %v3363 = vadd.f32 %v3257, %v3265
    %v3364 = vadd.f32 %v3258, %v3266
    %v3365 = vadd.f32 %v3259, %v3267
    %v3366 = vadd.f32 %v3260, %v3268
    %v3367 = vadd.f32 %v3261, %v3269
    %v3368 = vadd.f32 %v3360, %v3343
    %v3369 = vadd.f32 %v3361, %v3343
    %v3370 = vadd.f32 %v3362, %v3343
    %v3371 = vadd.f32 %v3363, %v3343
    %v3372 = vadd.f32 %v3364, %v3343
    %v3373 = vadd.f32 %v3365, %v3343
    %v3374 = vadd.f32 %v3366, %v3343
    %v3375 = vadd.f32 %v3367, %v3343
    %v3376 = vmul.f32 %v3368, %v3327
    %v3377 = vmul.f32 %v3369, %v3328
    %v3378 = vmul.f32 %v3370, %v3329
    %v3379 = vmul.f32 %v3371, %v3330
    %v3380 = vmul.f32 %v3372, %v3331
    %v3381 = vmul.f32 %v3373, %v3332
    %v3382 = vmul.f32 %v3374, %v3333
    %v3383 = vmul.f32 %v3375, %v3334
    %v3384 = vrcp.pop %v3376
    %v3385 = vmul.f32 %v3352, %v3384
    %v3386 = vrcp.pop %v3377
    %v3387 = vmul.f32 %v3353, %v3386
    %v3388 = vrcp.pop %v3378
    %v3389 = vmul.f32 %v3354, %v3388
    %v3390 = vrcp.pop %v3379
    %v3391 = vmul.f32 %v3355, %v3390
    %v3392 = vrcp.pop %v3380
    %v3393 = vmul.f32 %v3356, %v3392
    %v3394 = vrcp.pop %v3381
    %v3395 = vmul.f32 %v3357, %v3394
    %v3396 = vrcp.pop %v3382
    %v3397 = vmul.f32 %v3358, %v3396
    %v3398 = vrcp.pop %v3383
    %v3399 = vmul.f32 %v3359, %v3398
    %vm3400 = vcmask 46080
    %v3401 = vsel %vm3400, %v3385, 0.0
    %v3402 = vsel %vm3400, %v3387, 0.0
    %v3403 = vadd.f32 %v3401, %v3402
    %v3404 = vsel %vm3400, %v3389, 0.0
    %v3405 = vadd.f32 %v3403, %v3404
    %v3406 = vsel %vm3400, %v3391, 0.0
    %v3407 = vadd.f32 %v3405, %v3406
    %v3408 = vsel %vm3400, %v3393, 0.0
    %v3409 = vadd.f32 %v3407, %v3408
    %v3410 = vsel %vm3400, %v3395, 0.0
    %v3411 = vadd.f32 %v3409, %v3410
    %v3412 = vsel %vm3400, %v3397, 0.0
    %v3413 = vadd.f32 %v3411, %v3412
    %v3414 = vsel %vm3400, %v3399, 0.0
    %v3415 = vadd.f32 %v3413, %v3414
    %3416 = vadd.xlane.f32.xlu0 %v3415
    %v3417 = vpop.xlane.xlu0 %3416
    %v3418 = vrot.slane %v3417, 4
    %v3419 = vadd.f32 %v3417, %v3418
    %v3420 = vrot.slane %v3419, 2
    %v3421 = vadd.f32 %v3419, %v3420
    %v3422 = vrot.slane %v3421, 1
    %v3423 = vadd.f32 %v3421, %v3422
    %s3424 = vtos %v3423
    %v3425 = vstv %s3424
    %vm3426 = vcmask 0
    %3427 = vst.msk [vmem:[#allocation9] sm:$0x1] %vm3426, %v3425
    // Predicated region
    $region30: #{tpu_custom_call.1} parent=1 // pred_check
      _
    $region31: #{tpu_custom_call.1} parent=1 // pred_check_branch
      %3429 = sbr.rel (0) target = $region33
    $region32: #{tpu_custom_call.1} parent=1 // pred_region
      %s3431 = ssub.s32 16, 16
      %3432 = vsyncadd [#allocation4], %s3431
      %s3434 = sshll.u32 [#allocation9], 4
      %s3435 = int_to_ptr.vmem [resolvable:$true] %s3434
      %3437 = dma.vmem_to_hbm [thread:$0]  %s3435, 16, %s4, [#allocation4]
    $region33: #{tpu_custom_call.1} parent=1 // pred_fallthru
      _
    // Predicated region
    $region34: #{tpu_custom_call.1} parent=1 // pred_check
      _
    $region35: #{tpu_custom_call.1} parent=1 // pred_check_branch
      %3439 = sbr.rel (0) target = $region37
    $region36: #{tpu_custom_call.1} parent=1 // pred_region
      %3440 = dma.done [#allocation4], 16
    $region37: #{tpu_custom_call.1} parent=1 // pred_fallthru
      _
    %3441 = vsyncpa [#allocation3], 1
    %3442 = vsyncpa [#allocation8], 1
    %3443 = vsyncpa [#allocation4], 1
    %3444 = vsyncpa [#allocation5], 1

</llo_original>
